<compile_context>
chip_gen: v6e
topology: v6e:2x2x1
jax: 0.10.0
libtpu: 0.0.40
codegen_flags: <defaults>
</compile_context>

<pallas_src>
import functools
import math

import jax
import jax.numpy as jnp
from jax import lax
from jax.experimental import pallas as pl
from jax.experimental.pallas import tpu as pltpu


# ----------------------------------------------------------------------------- #
# Pallas kernels
# ----------------------------------------------------------------------------- #
def _conv_pool_kernel(a_ref, w_ref, b_ref, o_ref, *, pp, mode):
    """Fused conv-GEMM + max over pool positions + bias + epilogue.

    a_ref : (PP, K, tile_g)  bf16 im2col patches (leading axis = pool position)
    w_ref : (Cout, K)        bf16 reshaped conv weight
    b_ref : (Cout, 1)        f32 bias
    o_ref : (Cout, tile_g)   f32 lane-dense output tile
    """
    w = w_ref[...]
    acc = jnp.dot(w, a_ref[0], preferred_element_type=jnp.float32)
    for p in range(1, pp):                      # static unroll; max on the VPU
        acc = jnp.maximum(
            acc, jnp.dot(w, a_ref[p], preferred_element_type=jnp.float32))
    r = acc + b_ref[...]                        # bias commutes with max-pool
    if mode == "relu":                          # stage 1: relu(pool(conv)+b)
        r = jnp.maximum(r, 0.0)
    elif mode == "double_relu":                 # identity shortcut: relu(r + r)
        r = jnp.maximum(r + r, 0.0)
    # mode == "linear": plain pooled conv output
    o_ref[...] = r                              # lane-dense, unmasked store


def _add_relu_kernel(r_ref, s_ref, o_ref):
    # s_ref is (rows, 1) (or full): lane-broadcast add inside the kernel —
    # no HBM broadcast materialization in the wrapper.
    o_ref[...] = jnp.maximum(r_ref[...] + s_ref[...], 0.0)


# ----------------------------------------------------------------------------- #
# Wrapper-side patch construction (pad + strided slices only, (PP, K, G) order)
# ----------------------------------------------------------------------------- #
def _build_pool_patches(x_cnhw, kh, kw, stride, padding, pool_k):
    """im2col patches laid out (PP, K, G) for the transposed GEMM.

    x_cnhw : (Cin, N, H, W)   (channels-first-of-all internal layout)
    returns pat (pool_k*pool_k, kh*kw*Cin, N*Hop*Wop) and (N, Hop, Wop).
    K ordering is (cin, i, j), matching w_oihw.reshape(Cout, Cin*kh*kw).
    """
    Cin, N, H, W = x_cnhw.shape
    xp = jnp.pad(x_cnhw, ((0, 0), (0, 0), (padding, padding), (padding, padding)))
    Ho = (H + 2 * padding - kh) // stride + 1
    Wo = (W + 2 * padding - kw) // stride + 1
    Hop, Wop = Ho // pool_k, Wo // pool_k            # MaxPool2d floors
    if Hop < 1 or Wop < 1:
        raise ValueError("pooled output is empty (Hop/Wop == 0); the PyTorch "
                         "module fails for this configuration as well")
    big = pool_k * stride
    G = N * Hop * Wop
    K = kh * kw * Cin

    pp_blocks = []
    for pi in range(pool_k):
        for pj in range(pool_k):
            taps = []
            for i in range(kh):
                for j in range(kw):
                    r0 = pi * stride + i
                    c0 = pj * stride + j
                    sl = lax.slice(
                        xp,
                        (0, 0, r0, c0),
                        (Cin, N, r0 + (Hop - 1) * big + 1, c0 + (Wop - 1) * big + 1),
                        (1, 1, big, big))            # (Cin, N, Hop, Wop)
                    taps.append(sl.reshape(Cin, G))
            pp_blocks.append(jnp.stack(taps, axis=1).reshape(K, G))   # (K, G)
    pat = jnp.stack(pp_blocks, axis=0)               # (PP, K, G)
    return pat, (N, Hop, Wop)


def _choose_g_tiling(G):
    """Returns (padded G, lane tile).  >=2 blocks whenever we tile (keeps both
    v7x TensorCores busy); tiny G uses a single full-extent block (exempt from
    the (8,128) divisibility rule)."""
    if G < 256:
        return G, G
    for tile in (512, 256, 128):
        if G >= 2 * tile:
            return tile * math.ceil(G / tile), tile
    return G, G   # unreachable


# ----------------------------------------------------------------------------- #
# Fused conv + bias + maxpool (+ relu / identity-residual) stage
# ----------------------------------------------------------------------------- #
def conv_pool(x_cnhw, w_oihw, bias, *, stride, padding, pool_k, mode):
    """Conv2d(kh,kw,stride,padding) + bias + MaxPool2d(pool_k) [+ epilogue],
    one pallas_call.  x_cnhw (Cin,N,H,W) -> (Cout,N,Hop,Wop)."""
    Cout, Cin, kh, kw = w_oihw.shape
    assert x_cnhw.shape[0] == Cin, "conv weight in_channels mismatch"

    pat, (N, Hop, Wop) = _build_pool_patches(x_cnhw, kh, kw, stride, padding, pool_k)
    PP, K, G = pat.shape
    Gp, tile_g = _choose_g_tiling(G)
    if Gp != G:
        pat = jnp.pad(pat, ((0, 0), (0, 0), (0, Gp - G)))

    # bf16 MXU operands, f32 accumulation / epilogue (v5e VPU has no bf16).
    pat = pat.astype(jnp.bfloat16)
    wmat = w_oihw.reshape(Cout, K).astype(jnp.bfloat16)    # K order (cin, i, j)
    b2 = bias.reshape(Cout, 1).astype(jnp.float32)

    nblk = Gp // tile_g
    out = pl.pallas_call(
        functools.partial(_conv_pool_kernel, pp=PP, mode=mode),
        out_shape=jax.ShapeDtypeStruct((Cout, Gp), jnp.float32),
        grid=(nblk,),
        in_specs=[
            pl.BlockSpec((PP, K, tile_g), lambda g: (0, 0, g)),
            pl.BlockSpec((Cout, K), lambda g: (0, 0)),
            pl.BlockSpec((Cout, 1), lambda g: (0, 0)),
        ],
        out_specs=pl.BlockSpec((Cout, tile_g), lambda g: (0, g)),
        compiler_params=pltpu.CompilerParams(
            dimension_semantics=("parallel",),
            vmem_limit_bytes=32 * 1024 * 1024,
        ),
        cost_estimate=pl.CostEstimate(
            flops=2 * PP * K * Cout * Gp,
            transcendentals=0,
            bytes_accessed=2 * (PP * K * Gp + Cout * K) + 4 * (Cout + Cout * Gp),
        ),
    )(pat, wmat, b2)

    if Gp != G:
        out = out[:, :G]
    return out.reshape(Cout, N, Hop, Wop)


def add_relu_broadcast(r_cnhw, s_cnhw):
    """relu(r + s) with s broadcasting over r's spatial dims (conv-shortcut
    path).  Layout: rows = Cout*N, lanes = H*W; s kept tiny, broadcast in-kernel."""
    Co, N, Hr, Wr = r_cnhw.shape
    Cs, Ns, Hs, Ws = s_cnhw.shape
    assert (Co, N) == (Cs, Ns)
    r2 = r_cnhw.reshape(Co * N, Hr * Wr).astype(jnp.float32)
    if (Hs, Ws) == (Hr, Wr):
        s2 = s_cnhw.reshape(Co * N, Hr * Wr).astype(jnp.float32)
    else:
        assert (Hs, Ws) == (1, 1), "shortcut output must broadcast (1x1 spatial)"
        s2 = s_cnhw.reshape(Co * N, 1).astype(jnp.float32)
    out = pl.pallas_call(
        _add_relu_kernel,
        out_shape=jax.ShapeDtypeStruct((Co * N, Hr * Wr), jnp.float32),
    )(r2, s2)
    return out.reshape(Co, N, Hr, Wr)


# ----------------------------------------------------------------------------- #
# ResidualNetwork forward (Pallas-backed)
# ----------------------------------------------------------------------------- #
def residual_network_forward(x_nchw, params, in_channels, out_channels, stride):
    # Public I/O is NCHW (PyTorch).  Internal layout CNHW: channels on
    # sublanes, pooled pixels (N*Hop*Wop) on lanes -> lane-dense GEMM output
    # and zero activation transposes between stages.
    x = jnp.transpose(x_nchw, (1, 0, 2, 3)).astype(jnp.float32)
    k = out_channels                                    # MaxPool2d(out_channels)
    has_shortcut = (stride != 1 or in_channels != out_channels)

    # stage 1: conv3x3(stride, p=1) + bias + maxpool(k) + relu, one kernel.
    h = conv_pool(x, params["w1"], params["b1"],
                  stride=stride, padding=1, pool_k=k, mode="relu")

    if not has_shortcut:
        # identity shortcut: x += x  ->  relu(2*r), fused into stage 2's kernel.
        y = conv_pool(h, params["w2"], params["b2"],
                      stride=1, padding=1, pool_k=k, mode="double_relu")
    else:
        # Faithful to the PyTorch forward: the shortcut consumes the residual
        # output r, which only type-checks when in_channels == out_channels.
        assert in_channels == out_channels, (
            "shortcut conv1x1 has in_channels input channels but is applied to "
            "the residual output (out_channels) — same failure as the nn.Module")
        r = conv_pool(h, params["w2"], params["b2"],
                      stride=1, padding=1, pool_k=k, mode="linear")
        s = conv_pool(r, params["ws"], params["bs"],
                      stride=stride, padding=0, pool_k=k, mode="linear")
        y = add_relu_broadcast(r, s)                    # broadcasting +=, as torch

    return jnp.transpose(y, (1, 0, 2, 3))               # CNHW -> NCHW


# ----------------------------------------------------------------------------- #
# Pure-JAX reference (numerical sanity check)
# ----------------------------------------------------------------------------- #
def reference_forward(x_nchw, params, in_channels, out_channels, stride):
    def conv(x, w, b, s, p):
        y = lax.conv_general_dilated(
            x, w, (s, s), [(p, p), (p, p)],
            dimension_numbers=("NCHW", "OIHW", "NCHW"),
            precision=lax.Precision.HIGHEST,
        )
        return y + b[None, :, None, None]

    def mpool(x, kk):
        return lax.reduce_window(x, -jnp.inf, lax.max,
                                 (1, 1, kk, kk), (1, 1, kk, kk), "VALID")

    k = out_channels
    h = conv(x_nchw, params["w1"], params["b1"], stride, 1)
    h = jnp.maximum(mpool(h, k), 0.0)
    h = conv(h, params["w2"], params["b2"], 1, 1)
    r = mpool(h, k)
    if stride != 1 or in_channels != out_channels:
        s = mpool(conv(r, params["ws"], params["bs"], stride, 0), k)
    else:
        s = r
    return jnp.maximum(r + s, 0.0)


# ----------------------------------------------------------------------------- #
# Deterministic parameter init (synthetic; shapes match the nn.Module)
# ----------------------------------------------------------------------------- #
def init_params(key, in_ch, out_ch, stride):
    ks = jax.random.split(key, 6)
    sc = 0.1
    params = {
        "w1": sc * jax.random.normal(ks[0], (out_ch, in_ch, 3, 3), jnp.float32),
        "b1": sc * jax.random.normal(ks[1], (out_ch,), jnp.float32),
        "w2": sc * jax.random.normal(ks[2], (out_ch, out_ch, 3, 3), jnp.float32),
        "b2": sc * jax.random.normal(ks[3], (out_ch,), jnp.float32),
    }
    if stride != 1 or in_ch != out_ch:
        params["ws"] = sc * jax.random.normal(ks[4], (out_ch, in_ch, 1, 1), jnp.float32)
        params["bs"] = sc * jax.random.normal(ks[5], (out_ch,), jnp.float32)
    return params


if __name__ == "__main__":
    fwd = jax.jit(residual_network_forward, static_argnums=(2, 3, 4))

    # Config A: identity shortcut (stride=1, in==out) -> 2 fused pallas_calls.
    in_ch, out_ch, stride = 4, 4, 1
    kx, kp = jax.random.split(jax.random.PRNGKey(0))
    x = jax.random.normal(kx, (2, in_ch, 16, 16), jnp.float32)
    params = init_params(kp, in_ch, out_ch, stride)

    y = jax.block_until_ready(fwd(x, params, in_ch, out_ch, stride))
    y_ref = reference_forward(x, params, in_ch, out_ch, stride)
    assert y.shape == y_ref.shape == (2, out_ch, 1, 1), y.shape
    assert jnp.allclose(y, y_ref, rtol=2e-2, atol=2e-2), float(jnp.max(jnp.abs(y - y_ref)))

    # Config B: conv1x1 + maxpool shortcut (stride=2) -> 3 conv kernels + 1 add.
    in2, out2, s2 = 2, 2, 2
    kx2, kp2 = jax.random.split(jax.random.PRNGKey(1))
    x2 = jax.random.normal(kx2, (2, in2, 32, 32), jnp.float32)
    p2 = init_params(kp2, in2, out2, s2)

    y2 = jax.block_until_ready(fwd(x2, p2, in2, out2, s2))
    y2_ref = reference_forward(x2, p2, in2, out2, s2)
    assert y2.shape == y2_ref.shape == (2, out2, 4, 4), y2.shape
    assert jnp.allclose(y2, y2_ref, rtol=2e-2, atol=2e-2), float(jnp.max(jnp.abs(y2 - y2_ref)))

    print("KERNEL_OK")
</pallas_src>

<mosaic_0001>
module attributes {stable_mosaic.version = 11 : i64} {
  func.func @_conv_pool_kernel(%arg0: i32, %arg1: memref<16x36x32xbf16, #tpu.memory_space<vmem>>, %arg2: memref<4x36xbf16, #tpu.memory_space<vmem>>, %arg3: memref<4x1xf32, #tpu.memory_space<vmem>>, %arg4: memref<4x32xf32, #tpu.memory_space<vmem>>) attributes {dimension_semantics = [#tpu.dimension_semantics<parallel>], iteration_bounds = array<i64: 1>, scalar_prefetch = 0 : i64, scratch_operands = 0 : i64, tpu.core_type = #tpu.core_type<tc>, window_params = [{transform_indices = @transform_0, window_bounds = array<i64: 16, 36, 32>}, {pipeline_mode = #tpu.pipeline_mode<synchronous>, transform_indices = @transform_1, window_bounds = array<i64: 4, 36>}, {pipeline_mode = #tpu.pipeline_mode<synchronous>, transform_indices = @transform_2, window_bounds = array<i64: 4, 1>}, {transform_indices = @transform_3, window_bounds = array<i64: 4, 32>}]} {
    %c0 = arith.constant 0 : index
    %c0_0 = arith.constant 0 : index
    %0 = vector.load %arg2[%c0, %c0_0] : memref<4x36xbf16, #tpu.memory_space<vmem>>, vector<4x36xbf16>
    %c0_1 = arith.constant 0 : index
    %c0_2 = arith.constant 0 : index
    %c0_3 = arith.constant 0 : index
    %1 = vector.load %arg1[%c0_1, %c0_2, %c0_3] : memref<16x36x32xbf16, #tpu.memory_space<vmem>>, vector<1x36x32xbf16>
    %2 = vector.shape_cast %1 : vector<1x36x32xbf16> to vector<36x32xbf16>
    %cst = arith.constant dense<0.000000e+00> : vector<4x32xf32>
    %3 = tpu.matmul %0, %2, %cst {dimension_numbers = #tpu.dot_dimension_numbers<[1], [0], [0], [1], [0, 0, 1, 1], [], []>} : vector<4x36xbf16>, vector<36x32xbf16>, vector<4x32xf32> -> vector<4x32xf32>
    %c1 = arith.constant 1 : index
    %c0_4 = arith.constant 0 : index
    %c0_5 = arith.constant 0 : index
    %4 = vector.load %arg1[%c1, %c0_4, %c0_5] : memref<16x36x32xbf16, #tpu.memory_space<vmem>>, vector<1x36x32xbf16>
    %5 = vector.shape_cast %4 : vector<1x36x32xbf16> to vector<36x32xbf16>
    %cst_6 = arith.constant dense<0.000000e+00> : vector<4x32xf32>
    %6 = tpu.matmul %0, %5, %cst_6 {dimension_numbers = #tpu.dot_dimension_numbers<[1], [0], [0], [1], [0, 0, 1, 1], [], []>} : vector<4x36xbf16>, vector<36x32xbf16>, vector<4x32xf32> -> vector<4x32xf32>
    %7 = arith.maximumf %3, %6 : vector<4x32xf32>
    %c2 = arith.constant 2 : index
    %c0_7 = arith.constant 0 : index
    %c0_8 = arith.constant 0 : index
    %8 = vector.load %arg1[%c2, %c0_7, %c0_8] : memref<16x36x32xbf16, #tpu.memory_space<vmem>>, vector<1x36x32xbf16>
    %9 = vector.shape_cast %8 : vector<1x36x32xbf16> to vector<36x32xbf16>
    %cst_9 = arith.constant dense<0.000000e+00> : vector<4x32xf32>
    %10 = tpu.matmul %0, %9, %cst_9 {dimension_numbers = #tpu.dot_dimension_numbers<[1], [0], [0], [1], [0, 0, 1, 1], [], []>} : vector<4x36xbf16>, vector<36x32xbf16>, vector<4x32xf32> -> vector<4x32xf32>
    %11 = arith.maximumf %7, %10 : vector<4x32xf32>
    %c3 = arith.constant 3 : index
    %c0_10 = arith.constant 0 : index
    %c0_11 = arith.constant 0 : index
    %12 = vector.load %arg1[%c3, %c0_10, %c0_11] : memref<16x36x32xbf16, #tpu.memory_space<vmem>>, vector<1x36x32xbf16>
    %13 = vector.shape_cast %12 : vector<1x36x32xbf16> to vector<36x32xbf16>
    %cst_12 = arith.constant dense<0.000000e+00> : vector<4x32xf32>
    %14 = tpu.matmul %0, %13, %cst_12 {dimension_numbers = #tpu.dot_dimension_numbers<[1], [0], [0], [1], [0, 0, 1, 1], [], []>} : vector<4x36xbf16>, vector<36x32xbf16>, vector<4x32xf32> -> vector<4x32xf32>
    %15 = arith.maximumf %11, %14 : vector<4x32xf32>
    %c4 = arith.constant 4 : index
    %c0_13 = arith.constant 0 : index
    %c0_14 = arith.constant 0 : index
    %16 = vector.load %arg1[%c4, %c0_13, %c0_14] : memref<16x36x32xbf16, #tpu.memory_space<vmem>>, vector<1x36x32xbf16>
    %17 = vector.shape_cast %16 : vector<1x36x32xbf16> to vector<36x32xbf16>
    %cst_15 = arith.constant dense<0.000000e+00> : vector<4x32xf32>
    %18 = tpu.matmul %0, %17, %cst_15 {dimension_numbers = #tpu.dot_dimension_numbers<[1], [0], [0], [1], [0, 0, 1, 1], [], []>} : vector<4x36xbf16>, vector<36x32xbf16>, vector<4x32xf32> -> vector<4x32xf32>
    %19 = arith.maximumf %15, %18 : vector<4x32xf32>
    %c5 = arith.constant 5 : index
    %c0_16 = arith.constant 0 : index
    %c0_17 = arith.constant 0 : index
    %20 = vector.load %arg1[%c5, %c0_16, %c0_17] : memref<16x36x32xbf16, #tpu.memory_space<vmem>>, vector<1x36x32xbf16>
    %21 = vector.shape_cast %20 : vector<1x36x32xbf16> to vector<36x32xbf16>
    %cst_18 = arith.constant dense<0.000000e+00> : vector<4x32xf32>
    %22 = tpu.matmul %0, %21, %cst_18 {dimension_numbers = #tpu.dot_dimension_numbers<[1], [0], [0], [1], [0, 0, 1, 1], [], []>} : vector<4x36xbf16>, vector<36x32xbf16>, vector<4x32xf32> -> vector<4x32xf32>
    %23 = arith.maximumf %19, %22 : vector<4x32xf32>
    %c6 = arith.constant 6 : index
    %c0_19 = arith.constant 0 : index
    %c0_20 = arith.constant 0 : index
    %24 = vector.load %arg1[%c6, %c0_19, %c0_20] : memref<16x36x32xbf16, #tpu.memory_space<vmem>>, vector<1x36x32xbf16>
    %25 = vector.shape_cast %24 : vector<1x36x32xbf16> to vector<36x32xbf16>
    %cst_21 = arith.constant dense<0.000000e+00> : vector<4x32xf32>
    %26 = tpu.matmul %0, %25, %cst_21 {dimension_numbers = #tpu.dot_dimension_numbers<[1], [0], [0], [1], [0, 0, 1, 1], [], []>} : vector<4x36xbf16>, vector<36x32xbf16>, vector<4x32xf32> -> vector<4x32xf32>
    %27 = arith.maximumf %23, %26 : vector<4x32xf32>
    %c7 = arith.constant 7 : index
    %c0_22 = arith.constant 0 : index
    %c0_23 = arith.constant 0 : index
    %28 = vector.load %arg1[%c7, %c0_22, %c0_23] : memref<16x36x32xbf16, #tpu.memory_space<vmem>>, vector<1x36x32xbf16>
    %29 = vector.shape_cast %28 : vector<1x36x32xbf16> to vector<36x32xbf16>
    %cst_24 = arith.constant dense<0.000000e+00> : vector<4x32xf32>
    %30 = tpu.matmul %0, %29, %cst_24 {dimension_numbers = #tpu.dot_dimension_numbers<[1], [0], [0], [1], [0, 0, 1, 1], [], []>} : vector<4x36xbf16>, vector<36x32xbf16>, vector<4x32xf32> -> vector<4x32xf32>
    %31 = arith.maximumf %27, %30 : vector<4x32xf32>
    %c8 = arith.constant 8 : index
    %c0_25 = arith.constant 0 : index
    %c0_26 = arith.constant 0 : index
    %32 = vector.load %arg1[%c8, %c0_25, %c0_26] : memref<16x36x32xbf16, #tpu.memory_space<vmem>>, vector<1x36x32xbf16>
    %33 = vector.shape_cast %32 : vector<1x36x32xbf16> to vector<36x32xbf16>
    %cst_27 = arith.constant dense<0.000000e+00> : vector<4x32xf32>
    %34 = tpu.matmul %0, %33, %cst_27 {dimension_numbers = #tpu.dot_dimension_numbers<[1], [0], [0], [1], [0, 0, 1, 1], [], []>} : vector<4x36xbf16>, vector<36x32xbf16>, vector<4x32xf32> -> vector<4x32xf32>
    %35 = arith.maximumf %31, %34 : vector<4x32xf32>
    %c9 = arith.constant 9 : index
    %c0_28 = arith.constant 0 : index
    %c0_29 = arith.constant 0 : index
    %36 = vector.load %arg1[%c9, %c0_28, %c0_29] : memref<16x36x32xbf16, #tpu.memory_space<vmem>>, vector<1x36x32xbf16>
    %37 = vector.shape_cast %36 : vector<1x36x32xbf16> to vector<36x32xbf16>
    %cst_30 = arith.constant dense<0.000000e+00> : vector<4x32xf32>
    %38 = tpu.matmul %0, %37, %cst_30 {dimension_numbers = #tpu.dot_dimension_numbers<[1], [0], [0], [1], [0, 0, 1, 1], [], []>} : vector<4x36xbf16>, vector<36x32xbf16>, vector<4x32xf32> -> vector<4x32xf32>
    %39 = arith.maximumf %35, %38 : vector<4x32xf32>
    %c10 = arith.constant 10 : index
    %c0_31 = arith.constant 0 : index
    %c0_32 = arith.constant 0 : index
    %40 = vector.load %arg1[%c10, %c0_31, %c0_32] : memref<16x36x32xbf16, #tpu.memory_space<vmem>>, vector<1x36x32xbf16>
    %41 = vector.shape_cast %40 : vector<1x36x32xbf16> to vector<36x32xbf16>
    %cst_33 = arith.constant dense<0.000000e+00> : vector<4x32xf32>
    %42 = tpu.matmul %0, %41, %cst_33 {dimension_numbers = #tpu.dot_dimension_numbers<[1], [0], [0], [1], [0, 0, 1, 1], [], []>} : vector<4x36xbf16>, vector<36x32xbf16>, vector<4x32xf32> -> vector<4x32xf32>
    %43 = arith.maximumf %39, %42 : vector<4x32xf32>
    %c11 = arith.constant 11 : index
    %c0_34 = arith.constant 0 : index
    %c0_35 = arith.constant 0 : index
    %44 = vector.load %arg1[%c11, %c0_34, %c0_35] : memref<16x36x32xbf16, #tpu.memory_space<vmem>>, vector<1x36x32xbf16>
    %45 = vector.shape_cast %44 : vector<1x36x32xbf16> to vector<36x32xbf16>
    %cst_36 = arith.constant dense<0.000000e+00> : vector<4x32xf32>
    %46 = tpu.matmul %0, %45, %cst_36 {dimension_numbers = #tpu.dot_dimension_numbers<[1], [0], [0], [1], [0, 0, 1, 1], [], []>} : vector<4x36xbf16>, vector<36x32xbf16>, vector<4x32xf32> -> vector<4x32xf32>
    %47 = arith.maximumf %43, %46 : vector<4x32xf32>
    %c12 = arith.constant 12 : index
    %c0_37 = arith.constant 0 : index
    %c0_38 = arith.constant 0 : index
    %48 = vector.load %arg1[%c12, %c0_37, %c0_38] : memref<16x36x32xbf16, #tpu.memory_space<vmem>>, vector<1x36x32xbf16>
    %49 = vector.shape_cast %48 : vector<1x36x32xbf16> to vector<36x32xbf16>
    %cst_39 = arith.constant dense<0.000000e+00> : vector<4x32xf32>
    %50 = tpu.matmul %0, %49, %cst_39 {dimension_numbers = #tpu.dot_dimension_numbers<[1], [0], [0], [1], [0, 0, 1, 1], [], []>} : vector<4x36xbf16>, vector<36x32xbf16>, vector<4x32xf32> -> vector<4x32xf32>
    %51 = arith.maximumf %47, %50 : vector<4x32xf32>
    %c13 = arith.constant 13 : index
    %c0_40 = arith.constant 0 : index
    %c0_41 = arith.constant 0 : index
    %52 = vector.load %arg1[%c13, %c0_40, %c0_41] : memref<16x36x32xbf16, #tpu.memory_space<vmem>>, vector<1x36x32xbf16>
    %53 = vector.shape_cast %52 : vector<1x36x32xbf16> to vector<36x32xbf16>
    %cst_42 = arith.constant dense<0.000000e+00> : vector<4x32xf32>
    %54 = tpu.matmul %0, %53, %cst_42 {dimension_numbers = #tpu.dot_dimension_numbers<[1], [0], [0], [1], [0, 0, 1, 1], [], []>} : vector<4x36xbf16>, vector<36x32xbf16>, vector<4x32xf32> -> vector<4x32xf32>
    %55 = arith.maximumf %51, %54 : vector<4x32xf32>
    %c14 = arith.constant 14 : index
    %c0_43 = arith.constant 0 : index
    %c0_44 = arith.constant 0 : index
    %56 = vector.load %arg1[%c14, %c0_43, %c0_44] : memref<16x36x32xbf16, #tpu.memory_space<vmem>>, vector<1x36x32xbf16>
    %57 = vector.shape_cast %56 : vector<1x36x32xbf16> to vector<36x32xbf16>
    %cst_45 = arith.constant dense<0.000000e+00> : vector<4x32xf32>
    %58 = tpu.matmul %0, %57, %cst_45 {dimension_numbers = #tpu.dot_dimension_numbers<[1], [0], [0], [1], [0, 0, 1, 1], [], []>} : vector<4x36xbf16>, vector<36x32xbf16>, vector<4x32xf32> -> vector<4x32xf32>
    %59 = arith.maximumf %55, %58 : vector<4x32xf32>
    %c15 = arith.constant 15 : index
    %c0_46 = arith.constant 0 : index
    %c0_47 = arith.constant 0 : index
    %60 = vector.load %arg1[%c15, %c0_46, %c0_47] : memref<16x36x32xbf16, #tpu.memory_space<vmem>>, vector<1x36x32xbf16>
    %61 = vector.shape_cast %60 : vector<1x36x32xbf16> to vector<36x32xbf16>
    %cst_48 = arith.constant dense<0.000000e+00> : vector<4x32xf32>
    %62 = tpu.matmul %0, %61, %cst_48 {dimension_numbers = #tpu.dot_dimension_numbers<[1], [0], [0], [1], [0, 0, 1, 1], [], []>} : vector<4x36xbf16>, vector<36x32xbf16>, vector<4x32xf32> -> vector<4x32xf32>
    %63 = arith.maximumf %59, %62 : vector<4x32xf32>
    %c0_49 = arith.constant 0 : index
    %c0_50 = arith.constant 0 : index
    %64 = vector.load %arg3[%c0_49, %c0_50] : memref<4x1xf32, #tpu.memory_space<vmem>>, vector<4x1xf32>
    %65 = vector.broadcast %64 : vector<4x1xf32> to vector<4x32xf32>
    %66 = arith.addf %63, %65 : vector<4x32xf32>
    %cst_51 = arith.constant 0.000000e+00 : f32
    %67 = vector.broadcast %cst_51 : f32 to vector<4x32xf32>
    %68 = arith.maximumf %66, %67 : vector<4x32xf32>
    %c0_52 = arith.constant 0 : index
    %c0_53 = arith.constant 0 : index
    %69 = vector.load %arg4[%c0_52, %c0_53] : memref<4x32xf32, #tpu.memory_space<vmem>>, vector<4x32xf32>
    tpu.vector_store %arg4[%c0_52, %c0_53], %68 {strides = array<i32>} : memref<4x32xf32, #tpu.memory_space<vmem>>, vector<4x32xf32>,
    return
  }
  func.func @transform_0(%arg0: i32) -> (i32, i32, i32) {
    %c0_i32 = arith.constant 0 : i32
    %c0_i32_0 = arith.constant 0 : i32
    %c0_i32_1 = arith.constant 0 : i32
    return %c0_i32, %c0_i32_0, %arg0 : i32, i32, i32
  }
  func.func @transform_1(%arg0: i32) -> (i32, i32) {
    %c0_i32 = arith.constant 0 : i32
    %c0_i32_0 = arith.constant 0 : i32
    %c0_i32_1 = arith.constant 0 : i32
    return %c0_i32, %c0_i32_0 : i32, i32
  }
  func.func @transform_2(%arg0: i32) -> (i32, i32) {
    %c0_i32 = arith.constant 0 : i32
    %c0_i32_0 = arith.constant 0 : i32
    %c0_i32_1 = arith.constant 0 : i32
    return %c0_i32, %c0_i32_0 : i32, i32
  }
  func.func @transform_3(%arg0: i32) -> (i32, i32) {
    %c0_i32 = arith.constant 0 : i32
    %c0_i32_0 = arith.constant 0 : i32
    return %c0_i32, %arg0 : i32, i32
  }
}

module attributes {stable_mosaic.version = 11 : i64} {
  func.func @_conv_pool_kernel(%arg0: i32, %arg1: memref<16x36x2xbf16, #tpu.memory_space<vmem>>, %arg2: memref<4x36xbf16, #tpu.memory_space<vmem>>, %arg3: memref<4x1xf32, #tpu.memory_space<vmem>>, %arg4: memref<4x2xf32, #tpu.memory_space<vmem>>) attributes {dimension_semantics = [#tpu.dimension_semantics<parallel>], iteration_bounds = array<i64: 1>, scalar_prefetch = 0 : i64, scratch_operands = 0 : i64, tpu.core_type = #tpu.core_type<tc>, window_params = [{transform_indices = @transform_0, window_bounds = array<i64: 16, 36, 2>}, {pipeline_mode = #tpu.pipeline_mode<synchronous>, transform_indices = @transform_1, window_bounds = array<i64: 4, 36>}, {pipeline_mode = #tpu.pipeline_mode<synchronous>, transform_indices = @transform_2, window_bounds = array<i64: 4, 1>}, {transform_indices = @transform_3, window_bounds = array<i64: 4, 2>}]} {
    %c0 = arith.constant 0 : index
    %c0_0 = arith.constant 0 : index
    %0 = vector.load %arg2[%c0, %c0_0] : memref<4x36xbf16, #tpu.memory_space<vmem>>, vector<4x36xbf16>
    %c0_1 = arith.constant 0 : index
    %c0_2 = arith.constant 0 : index
    %c0_3 = arith.constant 0 : index
    %1 = vector.load %arg1[%c0_1, %c0_2, %c0_3] : memref<16x36x2xbf16, #tpu.memory_space<vmem>>, vector<1x36x2xbf16>
    %2 = vector.shape_cast %1 : vector<1x36x2xbf16> to vector<36x2xbf16>
    %cst = arith.constant dense<0.000000e+00> : vector<4x2xf32>
    %3 = tpu.matmul %0, %2, %cst {dimension_numbers = #tpu.dot_dimension_numbers<[1], [0], [0], [1], [0, 0, 1, 1], [], []>} : vector<4x36xbf16>, vector<36x2xbf16>, vector<4x2xf32> -> vector<4x2xf32>
    %c1 = arith.constant 1 : index
    %c0_4 = arith.constant 0 : index
    %c0_5 = arith.constant 0 : index
    %4 = vector.load %arg1[%c1, %c0_4, %c0_5] : memref<16x36x2xbf16, #tpu.memory_space<vmem>>, vector<1x36x2xbf16>
    %5 = vector.shape_cast %4 : vector<1x36x2xbf16> to vector<36x2xbf16>
    %cst_6 = arith.constant dense<0.000000e+00> : vector<4x2xf32>
    %6 = tpu.matmul %0, %5, %cst_6 {dimension_numbers = #tpu.dot_dimension_numbers<[1], [0], [0], [1], [0, 0, 1, 1], [], []>} : vector<4x36xbf16>, vector<36x2xbf16>, vector<4x2xf32> -> vector<4x2xf32>
    %7 = arith.maximumf %3, %6 : vector<4x2xf32>
    %c2 = arith.constant 2 : index
    %c0_7 = arith.constant 0 : index
    %c0_8 = arith.constant 0 : index
    %8 = vector.load %arg1[%c2, %c0_7, %c0_8] : memref<16x36x2xbf16, #tpu.memory_space<vmem>>, vector<1x36x2xbf16>
    %9 = vector.shape_cast %8 : vector<1x36x2xbf16> to vector<36x2xbf16>
    %cst_9 = arith.constant dense<0.000000e+00> : vector<4x2xf32>
    %10 = tpu.matmul %0, %9, %cst_9 {dimension_numbers = #tpu.dot_dimension_numbers<[1], [0], [0], [1], [0, 0, 1, 1], [], []>} : vector<4x36xbf16>, vector<36x2xbf16>, vector<4x2xf32> -> vector<4x2xf32>
    %11 = arith.maximumf %7, %10 : vector<4x2xf32>
    %c3 = arith.constant 3 : index
    %c0_10 = arith.constant 0 : index
    %c0_11 = arith.constant 0 : index
    %12 = vector.load %arg1[%c3, %c0_10, %c0_11] : memref<16x36x2xbf16, #tpu.memory_space<vmem>>, vector<1x36x2xbf16>
    %13 = vector.shape_cast %12 : vector<1x36x2xbf16> to vector<36x2xbf16>
    %cst_12 = arith.constant dense<0.000000e+00> : vector<4x2xf32>
    %14 = tpu.matmul %0, %13, %cst_12 {dimension_numbers = #tpu.dot_dimension_numbers<[1], [0], [0], [1], [0, 0, 1, 1], [], []>} : vector<4x36xbf16>, vector<36x2xbf16>, vector<4x2xf32> -> vector<4x2xf32>
    %15 = arith.maximumf %11, %14 : vector<4x2xf32>
    %c4 = arith.constant 4 : index
    %c0_13 = arith.constant 0 : index
    %c0_14 = arith.constant 0 : index
    %16 = vector.load %arg1[%c4, %c0_13, %c0_14] : memref<16x36x2xbf16, #tpu.memory_space<vmem>>, vector<1x36x2xbf16>
    %17 = vector.shape_cast %16 : vector<1x36x2xbf16> to vector<36x2xbf16>
    %cst_15 = arith.constant dense<0.000000e+00> : vector<4x2xf32>
    %18 = tpu.matmul %0, %17, %cst_15 {dimension_numbers = #tpu.dot_dimension_numbers<[1], [0], [0], [1], [0, 0, 1, 1], [], []>} : vector<4x36xbf16>, vector<36x2xbf16>, vector<4x2xf32> -> vector<4x2xf32>
    %19 = arith.maximumf %15, %18 : vector<4x2xf32>
    %c5 = arith.constant 5 : index
    %c0_16 = arith.constant 0 : index
    %c0_17 = arith.constant 0 : index
    %20 = vector.load %arg1[%c5, %c0_16, %c0_17] : memref<16x36x2xbf16, #tpu.memory_space<vmem>>, vector<1x36x2xbf16>
    %21 = vector.shape_cast %20 : vector<1x36x2xbf16> to vector<36x2xbf16>
    %cst_18 = arith.constant dense<0.000000e+00> : vector<4x2xf32>
    %22 = tpu.matmul %0, %21, %cst_18 {dimension_numbers = #tpu.dot_dimension_numbers<[1], [0], [0], [1], [0, 0, 1, 1], [], []>} : vector<4x36xbf16>, vector<36x2xbf16>, vector<4x2xf32> -> vector<4x2xf32>
    %23 = arith.maximumf %19, %22 : vector<4x2xf32>
    %c6 = arith.constant 6 : index
    %c0_19 = arith.constant 0 : index
    %c0_20 = arith.constant 0 : index
    %24 = vector.load %arg1[%c6, %c0_19, %c0_20] : memref<16x36x2xbf16, #tpu.memory_space<vmem>>, vector<1x36x2xbf16>
    %25 = vector.shape_cast %24 : vector<1x36x2xbf16> to vector<36x2xbf16>
    %cst_21 = arith.constant dense<0.000000e+00> : vector<4x2xf32>
    %26 = tpu.matmul %0, %25, %cst_21 {dimension_numbers = #tpu.dot_dimension_numbers<[1], [0], [0], [1], [0, 0, 1, 1], [], []>} : vector<4x36xbf16>, vector<36x2xbf16>, vector<4x2xf32> -> vector<4x2xf32>
    %27 = arith.maximumf %23, %26 : vector<4x2xf32>
    %c7 = arith.constant 7 : index
    %c0_22 = arith.constant 0 : index
    %c0_23 = arith.constant 0 : index
    %28 = vector.load %arg1[%c7, %c0_22, %c0_23] : memref<16x36x2xbf16, #tpu.memory_space<vmem>>, vector<1x36x2xbf16>
    %29 = vector.shape_cast %28 : vector<1x36x2xbf16> to vector<36x2xbf16>
    %cst_24 = arith.constant dense<0.000000e+00> : vector<4x2xf32>
    %30 = tpu.matmul %0, %29, %cst_24 {dimension_numbers = #tpu.dot_dimension_numbers<[1], [0], [0], [1], [0, 0, 1, 1], [], []>} : vector<4x36xbf16>, vector<36x2xbf16>, vector<4x2xf32> -> vector<4x2xf32>
    %31 = arith.maximumf %27, %30 : vector<4x2xf32>
    %c8 = arith.constant 8 : index
    %c0_25 = arith.constant 0 : index
    %c0_26 = arith.constant 0 : index
    %32 = vector.load %arg1[%c8, %c0_25, %c0_26] : memref<16x36x2xbf16, #tpu.memory_space<vmem>>, vector<1x36x2xbf16>
    %33 = vector.shape_cast %32 : vector<1x36x2xbf16> to vector<36x2xbf16>
    %cst_27 = arith.constant dense<0.000000e+00> : vector<4x2xf32>
    %34 = tpu.matmul %0, %33, %cst_27 {dimension_numbers = #tpu.dot_dimension_numbers<[1], [0], [0], [1], [0, 0, 1, 1], [], []>} : vector<4x36xbf16>, vector<36x2xbf16>, vector<4x2xf32> -> vector<4x2xf32>
    %35 = arith.maximumf %31, %34 : vector<4x2xf32>
    %c9 = arith.constant 9 : index
    %c0_28 = arith.constant 0 : index
    %c0_29 = arith.constant 0 : index
    %36 = vector.load %arg1[%c9, %c0_28, %c0_29] : memref<16x36x2xbf16, #tpu.memory_space<vmem>>, vector<1x36x2xbf16>
    %37 = vector.shape_cast %36 : vector<1x36x2xbf16> to vector<36x2xbf16>
    %cst_30 = arith.constant dense<0.000000e+00> : vector<4x2xf32>
    %38 = tpu.matmul %0, %37, %cst_30 {dimension_numbers = #tpu.dot_dimension_numbers<[1], [0], [0], [1], [0, 0, 1, 1], [], []>} : vector<4x36xbf16>, vector<36x2xbf16>, vector<4x2xf32> -> vector<4x2xf32>
    %39 = arith.maximumf %35, %38 : vector<4x2xf32>
    %c10 = arith.constant 10 : index
    %c0_31 = arith.constant 0 : index
    %c0_32 = arith.constant 0 : index
    %40 = vector.load %arg1[%c10, %c0_31, %c0_32] : memref<16x36x2xbf16, #tpu.memory_space<vmem>>, vector<1x36x2xbf16>
    %41 = vector.shape_cast %40 : vector<1x36x2xbf16> to vector<36x2xbf16>
    %cst_33 = arith.constant dense<0.000000e+00> : vector<4x2xf32>
    %42 = tpu.matmul %0, %41, %cst_33 {dimension_numbers = #tpu.dot_dimension_numbers<[1], [0], [0], [1], [0, 0, 1, 1], [], []>} : vector<4x36xbf16>, vector<36x2xbf16>, vector<4x2xf32> -> vector<4x2xf32>
    %43 = arith.maximumf %39, %42 : vector<4x2xf32>
    %c11 = arith.constant 11 : index
    %c0_34 = arith.constant 0 : index
    %c0_35 = arith.constant 0 : index
    %44 = vector.load %arg1[%c11, %c0_34, %c0_35] : memref<16x36x2xbf16, #tpu.memory_space<vmem>>, vector<1x36x2xbf16>
    %45 = vector.shape_cast %44 : vector<1x36x2xbf16> to vector<36x2xbf16>
    %cst_36 = arith.constant dense<0.000000e+00> : vector<4x2xf32>
    %46 = tpu.matmul %0, %45, %cst_36 {dimension_numbers = #tpu.dot_dimension_numbers<[1], [0], [0], [1], [0, 0, 1, 1], [], []>} : vector<4x36xbf16>, vector<36x2xbf16>, vector<4x2xf32> -> vector<4x2xf32>
    %47 = arith.maximumf %43, %46 : vector<4x2xf32>
    %c12 = arith.constant 12 : index
    %c0_37 = arith.constant 0 : index
    %c0_38 = arith.constant 0 : index
    %48 = vector.load %arg1[%c12, %c0_37, %c0_38] : memref<16x36x2xbf16, #tpu.memory_space<vmem>>, vector<1x36x2xbf16>
    %49 = vector.shape_cast %48 : vector<1x36x2xbf16> to vector<36x2xbf16>
    %cst_39 = arith.constant dense<0.000000e+00> : vector<4x2xf32>
    %50 = tpu.matmul %0, %49, %cst_39 {dimension_numbers = #tpu.dot_dimension_numbers<[1], [0], [0], [1], [0, 0, 1, 1], [], []>} : vector<4x36xbf16>, vector<36x2xbf16>, vector<4x2xf32> -> vector<4x2xf32>
    %51 = arith.maximumf %47, %50 : vector<4x2xf32>
    %c13 = arith.constant 13 : index
    %c0_40 = arith.constant 0 : index
    %c0_41 = arith.constant 0 : index
    %52 = vector.load %arg1[%c13, %c0_40, %c0_41] : memref<16x36x2xbf16, #tpu.memory_space<vmem>>, vector<1x36x2xbf16>
    %53 = vector.shape_cast %52 : vector<1x36x2xbf16> to vector<36x2xbf16>
    %cst_42 = arith.constant dense<0.000000e+00> : vector<4x2xf32>
    %54 = tpu.matmul %0, %53, %cst_42 {dimension_numbers = #tpu.dot_dimension_numbers<[1], [0], [0], [1], [0, 0, 1, 1], [], []>} : vector<4x36xbf16>, vector<36x2xbf16>, vector<4x2xf32> -> vector<4x2xf32>
    %55 = arith.maximumf %51, %54 : vector<4x2xf32>
    %c14 = arith.constant 14 : index
    %c0_43 = arith.constant 0 : index
    %c0_44 = arith.constant 0 : index
    %56 = vector.load %arg1[%c14, %c0_43, %c0_44] : memref<16x36x2xbf16, #tpu.memory_space<vmem>>, vector<1x36x2xbf16>
    %57 = vector.shape_cast %56 : vector<1x36x2xbf16> to vector<36x2xbf16>
    %cst_45 = arith.constant dense<0.000000e+00> : vector<4x2xf32>
    %58 = tpu.matmul %0, %57, %cst_45 {dimension_numbers = #tpu.dot_dimension_numbers<[1], [0], [0], [1], [0, 0, 1, 1], [], []>} : vector<4x36xbf16>, vector<36x2xbf16>, vector<4x2xf32> -> vector<4x2xf32>
    %59 = arith.maximumf %55, %58 : vector<4x2xf32>
    %c15 = arith.constant 15 : index
    %c0_46 = arith.constant 0 : index
    %c0_47 = arith.constant 0 : index
    %60 = vector.load %arg1[%c15, %c0_46, %c0_47] : memref<16x36x2xbf16, #tpu.memory_space<vmem>>, vector<1x36x2xbf16>
    %61 = vector.shape_cast %60 : vector<1x36x2xbf16> to vector<36x2xbf16>
    %cst_48 = arith.constant dense<0.000000e+00> : vector<4x2xf32>
    %62 = tpu.matmul %0, %61, %cst_48 {dimension_numbers = #tpu.dot_dimension_numbers<[1], [0], [0], [1], [0, 0, 1, 1], [], []>} : vector<4x36xbf16>, vector<36x2xbf16>, vector<4x2xf32> -> vector<4x2xf32>
    %63 = arith.maximumf %59, %62 : vector<4x2xf32>
    %c0_49 = arith.constant 0 : index
    %c0_50 = arith.constant 0 : index
    %64 = vector.load %arg3[%c0_49, %c0_50] : memref<4x1xf32, #tpu.memory_space<vmem>>, vector<4x1xf32>
    %65 = vector.broadcast %64 : vector<4x1xf32> to vector<4x2xf32>
    %66 = arith.addf %63, %65 : vector<4x2xf32>
    %67 = arith.addf %66, %66 : vector<4x2xf32>
    %cst_51 = arith.constant 0.000000e+00 : f32
    %68 = vector.broadcast %cst_51 : f32 to vector<4x2xf32>
    %69 = arith.maximumf %67, %68 : vector<4x2xf32>
    %c0_52 = arith.constant 0 : index
    %c0_53 = arith.constant 0 : index
    %70 = vector.load %arg4[%c0_52, %c0_53] : memref<4x2xf32, #tpu.memory_space<vmem>>, vector<4x2xf32>
    tpu.vector_store %arg4[%c0_52, %c0_53], %69 {strides = array<i32>} : memref<4x2xf32, #tpu.memory_space<vmem>>, vector<4x2xf32>,
    return
  }
  func.func @transform_0(%arg0: i32) -> (i32, i32, i32) {
    %c0_i32 = arith.constant 0 : i32
    %c0_i32_0 = arith.constant 0 : i32
    %c0_i32_1 = arith.constant 0 : i32
    return %c0_i32, %c0_i32_0, %arg0 : i32, i32, i32
  }
  func.func @transform_1(%arg0: i32) -> (i32, i32) {
    %c0_i32 = arith.constant 0 : i32
    %c0_i32_0 = arith.constant 0 : i32
    %c0_i32_1 = arith.constant 0 : i32
    return %c0_i32, %c0_i32_0 : i32, i32
  }
  func.func @transform_2(%arg0: i32) -> (i32, i32) {
    %c0_i32 = arith.constant 0 : i32
    %c0_i32_0 = arith.constant 0 : i32
    %c0_i32_1 = arith.constant 0 : i32
    return %c0_i32, %c0_i32_0 : i32, i32
  }
  func.func @transform_3(%arg0: i32) -> (i32, i32) {
    %c0_i32 = arith.constant 0 : i32
    %c0_i32_0 = arith.constant 0 : i32
    return %c0_i32, %arg0 : i32, i32
  }
}

</mosaic_0001>

<llo_original>
// kernel: residual_network_forward.2
$region0: #{residual_network_forward.2}
  #allocation0 [shape = 'u32[]', space=smem, size = 0x4, offset = 0x4, fixed_abs, tag = 'smem constant byte address 0x4 - core index']
  #allocation1 [shape = 'u32[144,128]{1,0:T(1,128)}', space=vmem, size = 0x12000, scoped, tag = 'internal scratch']
  %s0 = inlined_call_operand.vmem [shape: bf16[16,36,32], index: 0, kind: input, shape index: {}]
  %s1 = inlined_call_operand.vmem [shape: bf16[4,36], index: 1, kind: input, shape index: {}]
  %s2 = inlined_call_operand.vmem [shape: f32[4,1], index: 2, kind: input, shape index: {}]
  %s3 = inlined_call_operand.vmem [shape: f32[4,32], index: 3, kind: output, shape index: {}]
  %s4 = sld [smem:[#allocation0]]
  $region22: #{residual_network_forward.2} parent=0
    _
  %s6 = ssub.s32 1, %s4
  %s7 = scalar_select 0, %s6, %s4
  // Predicated region
  $region2: #{residual_network_forward.2} parent=0 // pred_check
    _
  $region3: #{residual_network_forward.2} parent=0 // pred_check_branch
    %9 = sbr.rel (0) target = $region5
  $region4: #{residual_network_forward.2} parent=0 // pred_region
    _
  $region5: #{residual_network_forward.2} parent=0 // pred_fallthru
    _
  // Predicated region
  $region6: #{residual_network_forward.2} parent=0 // pred_check
    _
  $region7: #{residual_network_forward.2} parent=0 // pred_check_branch
    %11 = sbr.rel (0) target = $region9
  $region8: #{residual_network_forward.2} parent=0 // pred_region
    _
  $region9: #{residual_network_forward.2} parent=0 // pred_fallthru
    _
  // Predicated region
  $region10: #{residual_network_forward.2} parent=0 // pred_check
    _
  $region11: #{residual_network_forward.2} parent=0 // pred_check_branch
    %13 = sbr.rel (0) target = $region13
  $region12: #{residual_network_forward.2} parent=0 // pred_region
    _
  $region13: #{residual_network_forward.2} parent=0 // pred_fallthru
    _
  %v15 = vld [vmem:[%s1] sm:$0x3]
  %v16 = vld [vmem:[%s0] sm:$0xf]
  %v17 = vld [vmem:[%s0 + $0x4] sm:$0xf]
  %v18 = vld [vmem:[%s0 + $0x8] sm:$0xf]
  %v19 = vld [vmem:[%s0 + $0xc] sm:$0xf]
  %v20 = vld [vmem:[%s0 + $0x10] sm:$0x3]
  %v26 = vunpack.c.l.b16 %v16
  %v27 = vunpack.c.l.b16 %v17
  %v28 = vunpack.c.l.b16 %v18
  %v29 = vunpack.c.l.b16 %v19
  %v30 = vunpack.c.l.b16 %v20
  %v31 = vpack.c.b16 %v27, %v26
  %v32 = vpack.c.b16 %v29, %v28
  %v33 = vpack.c.b16 %v30, %v30
  %vm36 = vcmask 293888
  %v38 = vsel %vm36, %v15, 0
  %vm40 = vcmask 1041408
  %v42 = vsel %vm40, %v33, 0
  %44 = vmatprep.subr.bf16.mxu0 0
  %45 = vmatpush1.bf16.msra.mxu0 0
  %46 = vmatprep.subr.bf16.mxu0 0
  %47 = vmatpush1.bf16.msra.mxu0 0
  %48 = vmatprep.subr.bf16.mxu0 0
  %49 = vmatpush1.bf16.msra.mxu0 0
  %50 = vmatprep.subr.bf16.mxu0 0
  %51 = vmatpush1.bf16.msra.mxu0 0
  %52 = vmatprep.subr.bf16.mxu0 0
  %53 = vmatpush1.bf16.msra.mxu0 0
  %54 = vmatprep.subr.bf16.mxu0 0
  %55 = vmatpush1.bf16.msra.mxu0 %v42
  %56 = vmatprep.subr.bf16.mxu0 0
  %57 = vmatpush1.bf16.msra.mxu0 %v32
  %58 = vmatprep.subr.bf16.mxu0 0
  %59 = vmatpush1.bf16.msra.mxu0 %v31
  %60 = vmatprep.subr.bf16.mxu0 0
  %61 = vmatpush2.bf16.msra.mxu0 0
  %62 = vmatprep.subr.bf16.mxu0 0
  %63 = vmatpush2.bf16.msra.mxu0 0
  %64 = vmatprep.subr.bf16.mxu0 0
  %65 = vmatpush2.bf16.msra.mxu0 0
  %66 = vmatprep.subr.bf16.mxu0 0
  %67 = vmatpush2.bf16.msra.mxu0 0
  %68 = vmatprep.subr.bf16.mxu0 0
  %69 = vmatpush2.bf16.msra.mxu0 0
  %70 = vmatprep.subr.bf16.mxu0 0
  %71 = vmatpush2.bf16.msra.mxu0 0
  %72 = vmatprep.subr.bf16.mxu0 0
  %73 = vmatpush2.bf16.msra.mxu0 0
  %74 = vmatprep.subr.bf16.mxu0 0
  %75 = vmatpush2.bf16.msra.mxu0 0
  %76 = vmatprep.mubr.bf16.mxu0 0
  %77 = vmatmul.mubr.bf16.gmra.mxu0 %v38
  %v78 = vpop.f32.mrf.mxu0
  %v79 = vadd.f32 0.0, %v78
  %v80 = vpop.f32.mrf.mxu0
  %v81 = vpop.f32.mrf.mxu0
  %v82 = vpop.f32.mrf.mxu0
  %83 = vdwg.mxu0
  %s84 = scalar_lea.vmem %s0, 20
  %v85 = vld [vmem:[%s84] sm:$0xf]
  %v86 = vld [vmem:[%s84 + $0x4] sm:$0xf]
  %v87 = vld [vmem:[%s84 + $0x8] sm:$0xf]
  %v88 = vld [vmem:[%s84 + $0xc] sm:$0xf]
  %v89 = vld [vmem:[%s84 + $0x10] sm:$0x3]
  %v95 = vunpack.c.l.b16 %v85
  %v96 = vunpack.c.l.b16 %v86
  %v97 = vunpack.c.l.b16 %v87
  %v98 = vunpack.c.l.b16 %v88
  %v99 = vunpack.c.l.b16 %v89
  %v100 = vpack.c.b16 %v96, %v95
  %v101 = vpack.c.b16 %v98, %v97
  %v102 = vpack.c.b16 %v99, %v99
  %v106 = vsel %vm40, %v102, 0
  %108 = vmatprep.subr.bf16.mxu0 0
  %109 = vmatpush1.bf16.msra.mxu0 0
  %110 = vmatprep.subr.bf16.mxu0 0
  %111 = vmatpush1.bf16.msra.mxu0 0
  %112 = vmatprep.subr.bf16.mxu0 0
  %113 = vmatpush1.bf16.msra.mxu0 0
  %114 = vmatprep.subr.bf16.mxu0 0
  %115 = vmatpush1.bf16.msra.mxu0 0
  %116 = vmatprep.subr.bf16.mxu0 0
  %117 = vmatpush1.bf16.msra.mxu0 0
  %118 = vmatprep.subr.bf16.mxu0 0
  %119 = vmatpush1.bf16.msra.mxu0 %v106
  %120 = vmatprep.subr.bf16.mxu0 0
  %121 = vmatpush1.bf16.msra.mxu0 %v101
  %122 = vmatprep.subr.bf16.mxu0 0
  %123 = vmatpush1.bf16.msra.mxu0 %v100
  %124 = vmatprep.subr.bf16.mxu0 0
  %125 = vmatpush2.bf16.msra.mxu0 0
  %126 = vmatprep.subr.bf16.mxu0 0
  %127 = vmatpush2.bf16.msra.mxu0 0
  %128 = vmatprep.subr.bf16.mxu0 0
  %129 = vmatpush2.bf16.msra.mxu0 0
  %130 = vmatprep.subr.bf16.mxu0 0
  %131 = vmatpush2.bf16.msra.mxu0 0
  %132 = vmatprep.subr.bf16.mxu0 0
  %133 = vmatpush2.bf16.msra.mxu0 0
  %134 = vmatprep.subr.bf16.mxu0 0
  %135 = vmatpush2.bf16.msra.mxu0 0
  %136 = vmatprep.subr.bf16.mxu0 0
  %137 = vmatpush2.bf16.msra.mxu0 0
  %138 = vmatprep.subr.bf16.mxu0 0
  %139 = vmatpush2.bf16.msra.mxu0 0
  %140 = vmatprep.mubr.bf16.mxu0 0
  %141 = vmatmul.mubr.bf16.gmra.mxu0 %v38
  %v142 = vpop.f32.mrf.mxu0
  %v143 = vadd.f32 0.0, %v142
  %v144 = vpop.f32.mrf.mxu0
  %v145 = vpop.f32.mrf.mxu0
  %v146 = vpop.f32.mrf.mxu0
  %147 = vdwg.mxu0
  %v148 = vmax.f32 %v79, %v143
  %s149 = scalar_lea.vmem %s0, 40
  %v150 = vld [vmem:[%s149] sm:$0xf]
  %v151 = vld [vmem:[%s149 + $0x4] sm:$0xf]
  %v152 = vld [vmem:[%s149 + $0x8] sm:$0xf]
  %v153 = vld [vmem:[%s149 + $0xc] sm:$0xf]
  %v154 = vld [vmem:[%s149 + $0x10] sm:$0x3]
  %v160 = vunpack.c.l.b16 %v150
  %v161 = vunpack.c.l.b16 %v151
  %v162 = vunpack.c.l.b16 %v152
  %v163 = vunpack.c.l.b16 %v153
  %v164 = vunpack.c.l.b16 %v154
  %v165 = vpack.c.b16 %v161, %v160
  %v166 = vpack.c.b16 %v163, %v162
  %v167 = vpack.c.b16 %v164, %v164
  %v171 = vsel %vm40, %v167, 0
  %173 = vmatprep.subr.bf16.mxu0 0
  %174 = vmatpush1.bf16.msra.mxu0 0
  %175 = vmatprep.subr.bf16.mxu0 0
  %176 = vmatpush1.bf16.msra.mxu0 0
  %177 = vmatprep.subr.bf16.mxu0 0
  %178 = vmatpush1.bf16.msra.mxu0 0
  %179 = vmatprep.subr.bf16.mxu0 0
  %180 = vmatpush1.bf16.msra.mxu0 0
  %181 = vmatprep.subr.bf16.mxu0 0
  %182 = vmatpush1.bf16.msra.mxu0 0
  %183 = vmatprep.subr.bf16.mxu0 0
  %184 = vmatpush1.bf16.msra.mxu0 %v171
  %185 = vmatprep.subr.bf16.mxu0 0
  %186 = vmatpush1.bf16.msra.mxu0 %v166
  %187 = vmatprep.subr.bf16.mxu0 0
  %188 = vmatpush1.bf16.msra.mxu0 %v165
  %189 = vmatprep.subr.bf16.mxu0 0
  %190 = vmatpush2.bf16.msra.mxu0 0
  %191 = vmatprep.subr.bf16.mxu0 0
  %192 = vmatpush2.bf16.msra.mxu0 0
  %193 = vmatprep.subr.bf16.mxu0 0
  %194 = vmatpush2.bf16.msra.mxu0 0
  %195 = vmatprep.subr.bf16.mxu0 0
  %196 = vmatpush2.bf16.msra.mxu0 0
  %197 = vmatprep.subr.bf16.mxu0 0
  %198 = vmatpush2.bf16.msra.mxu0 0
  %199 = vmatprep.subr.bf16.mxu0 0
  %200 = vmatpush2.bf16.msra.mxu0 0
  %201 = vmatprep.subr.bf16.mxu0 0
  %202 = vmatpush2.bf16.msra.mxu0 0
  %203 = vmatprep.subr.bf16.mxu0 0
  %204 = vmatpush2.bf16.msra.mxu0 0
  %205 = vmatprep.mubr.bf16.mxu0 0
  %206 = vmatmul.mubr.bf16.gmra.mxu0 %v38
  %v207 = vpop.f32.mrf.mxu0
  %v208 = vadd.f32 0.0, %v207
  %v209 = vpop.f32.mrf.mxu0
  %v210 = vpop.f32.mrf.mxu0
  %v211 = vpop.f32.mrf.mxu0
  %212 = vdwg.mxu0
  %v213 = vmax.f32 %v148, %v208
  %s214 = scalar_lea.vmem %s0, 60
  %v215 = vld [vmem:[%s214] sm:$0xf]
  %v216 = vld [vmem:[%s214 + $0x4] sm:$0xf]
  %v217 = vld [vmem:[%s214 + $0x8] sm:$0xf]
  %v218 = vld [vmem:[%s214 + $0xc] sm:$0xf]
  %v219 = vld [vmem:[%s214 + $0x10] sm:$0x3]
  %v225 = vunpack.c.l.b16 %v215
  %v226 = vunpack.c.l.b16 %v216
  %v227 = vunpack.c.l.b16 %v217
  %v228 = vunpack.c.l.b16 %v218
  %v229 = vunpack.c.l.b16 %v219
  %v230 = vpack.c.b16 %v226, %v225
  %v231 = vpack.c.b16 %v228, %v227
  %v232 = vpack.c.b16 %v229, %v229
  %v236 = vsel %vm40, %v232, 0
  %238 = vmatprep.subr.bf16.mxu0 0
  %239 = vmatpush1.bf16.msra.mxu0 0
  %240 = vmatprep.subr.bf16.mxu0 0
  %241 = vmatpush1.bf16.msra.mxu0 0
  %242 = vmatprep.subr.bf16.mxu0 0
  %243 = vmatpush1.bf16.msra.mxu0 0
  %244 = vmatprep.subr.bf16.mxu0 0
  %245 = vmatpush1.bf16.msra.mxu0 0
  %246 = vmatprep.subr.bf16.mxu0 0
  %247 = vmatpush1.bf16.msra.mxu0 0
  %248 = vmatprep.subr.bf16.mxu0 0
  %249 = vmatpush1.bf16.msra.mxu0 %v236
  %250 = vmatprep.subr.bf16.mxu0 0
  %251 = vmatpush1.bf16.msra.mxu0 %v231
  %252 = vmatprep.subr.bf16.mxu0 0
  %253 = vmatpush1.bf16.msra.mxu0 %v230
  %254 = vmatprep.subr.bf16.mxu0 0
  %255 = vmatpush2.bf16.msra.mxu0 0
  %256 = vmatprep.subr.bf16.mxu0 0
  %257 = vmatpush2.bf16.msra.mxu0 0
  %258 = vmatprep.subr.bf16.mxu0 0
  %259 = vmatpush2.bf16.msra.mxu0 0
  %260 = vmatprep.subr.bf16.mxu0 0
  %261 = vmatpush2.bf16.msra.mxu0 0
  %262 = vmatprep.subr.bf16.mxu0 0
  %263 = vmatpush2.bf16.msra.mxu0 0
  %264 = vmatprep.subr.bf16.mxu0 0
  %265 = vmatpush2.bf16.msra.mxu0 0
  %266 = vmatprep.subr.bf16.mxu0 0
  %267 = vmatpush2.bf16.msra.mxu0 0
  %268 = vmatprep.subr.bf16.mxu0 0
  %269 = vmatpush2.bf16.msra.mxu0 0
  %270 = vmatprep.mubr.bf16.mxu0 0
  %271 = vmatmul.mubr.bf16.gmra.mxu0 %v38
  %v272 = vpop.f32.mrf.mxu0
  %v273 = vadd.f32 0.0, %v272
  %v274 = vpop.f32.mrf.mxu0
  %v275 = vpop.f32.mrf.mxu0
  %v276 = vpop.f32.mrf.mxu0
  %277 = vdwg.mxu0
  %v278 = vmax.f32 %v213, %v273
  %s279 = scalar_lea.vmem %s0, 80
  %v280 = vld [vmem:[%s279] sm:$0xf]
  %v281 = vld [vmem:[%s279 + $0x4] sm:$0xf]
  %v282 = vld [vmem:[%s279 + $0x8] sm:$0xf]
  %v283 = vld [vmem:[%s279 + $0xc] sm:$0xf]
  %v284 = vld [vmem:[%s279 + $0x10] sm:$0x3]
  %v290 = vunpack.c.l.b16 %v280
  %v291 = vunpack.c.l.b16 %v281
  %v292 = vunpack.c.l.b16 %v282
  %v293 = vunpack.c.l.b16 %v283
  %v294 = vunpack.c.l.b16 %v284
  %v295 = vpack.c.b16 %v291, %v290
  %v296 = vpack.c.b16 %v293, %v292
  %v297 = vpack.c.b16 %v294, %v294
  %v301 = vsel %vm40, %v297, 0
  %303 = vmatprep.subr.bf16.mxu0 0
  %304 = vmatpush1.bf16.msra.mxu0 0
  %305 = vmatprep.subr.bf16.mxu0 0
  %306 = vmatpush1.bf16.msra.mxu0 0
  %307 = vmatprep.subr.bf16.mxu0 0
  %308 = vmatpush1.bf16.msra.mxu0 0
  %309 = vmatprep.subr.bf16.mxu0 0
  %310 = vmatpush1.bf16.msra.mxu0 0
  %311 = vmatprep.subr.bf16.mxu0 0
  %312 = vmatpush1.bf16.msra.mxu0 0
  %313 = vmatprep.subr.bf16.mxu0 0
  %314 = vmatpush1.bf16.msra.mxu0 %v301
  %315 = vmatprep.subr.bf16.mxu0 0
  %316 = vmatpush1.bf16.msra.mxu0 %v296
  %317 = vmatprep.subr.bf16.mxu0 0
  %318 = vmatpush1.bf16.msra.mxu0 %v295
  %319 = vmatprep.subr.bf16.mxu0 0
  %320 = vmatpush2.bf16.msra.mxu0 0
  %321 = vmatprep.subr.bf16.mxu0 0
  %322 = vmatpush2.bf16.msra.mxu0 0
  %323 = vmatprep.subr.bf16.mxu0 0
  %324 = vmatpush2.bf16.msra.mxu0 0
  %325 = vmatprep.subr.bf16.mxu0 0
  %326 = vmatpush2.bf16.msra.mxu0 0
  %327 = vmatprep.subr.bf16.mxu0 0
  %328 = vmatpush2.bf16.msra.mxu0 0
  %329 = vmatprep.subr.bf16.mxu0 0
  %330 = vmatpush2.bf16.msra.mxu0 0
  %331 = vmatprep.subr.bf16.mxu0 0
  %332 = vmatpush2.bf16.msra.mxu0 0
  %333 = vmatprep.subr.bf16.mxu0 0
  %334 = vmatpush2.bf16.msra.mxu0 0
  %335 = vmatprep.mubr.bf16.mxu0 0
  %336 = vmatmul.mubr.bf16.gmra.mxu0 %v38
  %v337 = vpop.f32.mrf.mxu0
  %v338 = vadd.f32 0.0, %v337
  %v339 = vpop.f32.mrf.mxu0
  %v340 = vpop.f32.mrf.mxu0
  %v341 = vpop.f32.mrf.mxu0
  %342 = vdwg.mxu0
  %v343 = vmax.f32 %v278, %v338
  %s344 = scalar_lea.vmem %s0, 100
  %v345 = vld [vmem:[%s344] sm:$0xf]
  %v346 = vld [vmem:[%s344 + $0x4] sm:$0xf]
  %v347 = vld [vmem:[%s344 + $0x8] sm:$0xf]
  %v348 = vld [vmem:[%s344 + $0xc] sm:$0xf]
  %v349 = vld [vmem:[%s344 + $0x10] sm:$0x3]
  %v355 = vunpack.c.l.b16 %v345
  %v356 = vunpack.c.l.b16 %v346
  %v357 = vunpack.c.l.b16 %v347
  %v358 = vunpack.c.l.b16 %v348
  %v359 = vunpack.c.l.b16 %v349
  %v360 = vpack.c.b16 %v356, %v355
  %v361 = vpack.c.b16 %v358, %v357
  %v362 = vpack.c.b16 %v359, %v359
  %v366 = vsel %vm40, %v362, 0
  %368 = vmatprep.subr.bf16.mxu0 0
  %369 = vmatpush1.bf16.msra.mxu0 0
  %370 = vmatprep.subr.bf16.mxu0 0
  %371 = vmatpush1.bf16.msra.mxu0 0
  %372 = vmatprep.subr.bf16.mxu0 0
  %373 = vmatpush1.bf16.msra.mxu0 0
  %374 = vmatprep.subr.bf16.mxu0 0
  %375 = vmatpush1.bf16.msra.mxu0 0
  %376 = vmatprep.subr.bf16.mxu0 0
  %377 = vmatpush1.bf16.msra.mxu0 0
  %378 = vmatprep.subr.bf16.mxu0 0
  %379 = vmatpush1.bf16.msra.mxu0 %v366
  %380 = vmatprep.subr.bf16.mxu0 0
  %381 = vmatpush1.bf16.msra.mxu0 %v361
  %382 = vmatprep.subr.bf16.mxu0 0
  %383 = vmatpush1.bf16.msra.mxu0 %v360
  %384 = vmatprep.subr.bf16.mxu0 0
  %385 = vmatpush2.bf16.msra.mxu0 0
  %386 = vmatprep.subr.bf16.mxu0 0
  %387 = vmatpush2.bf16.msra.mxu0 0
  %388 = vmatprep.subr.bf16.mxu0 0
  %389 = vmatpush2.bf16.msra.mxu0 0
  %390 = vmatprep.subr.bf16.mxu0 0
  %391 = vmatpush2.bf16.msra.mxu0 0
  %392 = vmatprep.subr.bf16.mxu0 0
  %393 = vmatpush2.bf16.msra.mxu0 0
  %394 = vmatprep.subr.bf16.mxu0 0
  %395 = vmatpush2.bf16.msra.mxu0 0
  %396 = vmatprep.subr.bf16.mxu0 0
  %397 = vmatpush2.bf16.msra.mxu0 0
  %398 = vmatprep.subr.bf16.mxu0 0
  %399 = vmatpush2.bf16.msra.mxu0 0
  %400 = vmatprep.mubr.bf16.mxu0 0
  %401 = vmatmul.mubr.bf16.gmra.mxu0 %v38
  %v402 = vpop.f32.mrf.mxu0
  %v403 = vadd.f32 0.0, %v402
  %v404 = vpop.f32.mrf.mxu0
  %v405 = vpop.f32.mrf.mxu0
  %v406 = vpop.f32.mrf.mxu0
  %407 = vdwg.mxu0
  %v408 = vmax.f32 %v343, %v403
  %s409 = scalar_lea.vmem %s0, 120
  %v410 = vld [vmem:[%s409] sm:$0xf]
  %v411 = vld [vmem:[%s409 + $0x4] sm:$0xf]
  %v412 = vld [vmem:[%s409 + $0x8] sm:$0xf]
  %v413 = vld [vmem:[%s409 + $0xc] sm:$0xf]
  %v414 = vld [vmem:[%s409 + $0x10] sm:$0x3]
  %v420 = vunpack.c.l.b16 %v410
  %v421 = vunpack.c.l.b16 %v411
  %v422 = vunpack.c.l.b16 %v412
  %v423 = vunpack.c.l.b16 %v413
  %v424 = vunpack.c.l.b16 %v414
  %v425 = vpack.c.b16 %v421, %v420
  %v426 = vpack.c.b16 %v423, %v422
  %v427 = vpack.c.b16 %v424, %v424
  %v431 = vsel %vm40, %v427, 0
  %433 = vmatprep.subr.bf16.mxu0 0
  %434 = vmatpush1.bf16.msra.mxu0 0
  %435 = vmatprep.subr.bf16.mxu0 0
  %436 = vmatpush1.bf16.msra.mxu0 0
  %437 = vmatprep.subr.bf16.mxu0 0
  %438 = vmatpush1.bf16.msra.mxu0 0
  %439 = vmatprep.subr.bf16.mxu0 0
  %440 = vmatpush1.bf16.msra.mxu0 0
  %441 = vmatprep.subr.bf16.mxu0 0
  %442 = vmatpush1.bf16.msra.mxu0 0
  %443 = vmatprep.subr.bf16.mxu0 0
  %444 = vmatpush1.bf16.msra.mxu0 %v431
  %445 = vmatprep.subr.bf16.mxu0 0
  %446 = vmatpush1.bf16.msra.mxu0 %v426
  %447 = vmatprep.subr.bf16.mxu0 0
  %448 = vmatpush1.bf16.msra.mxu0 %v425
  %449 = vmatprep.subr.bf16.mxu0 0
  %450 = vmatpush2.bf16.msra.mxu0 0
  %451 = vmatprep.subr.bf16.mxu0 0
  %452 = vmatpush2.bf16.msra.mxu0 0
  %453 = vmatprep.subr.bf16.mxu0 0
  %454 = vmatpush2.bf16.msra.mxu0 0
  %455 = vmatprep.subr.bf16.mxu0 0
  %456 = vmatpush2.bf16.msra.mxu0 0
  %457 = vmatprep.subr.bf16.mxu0 0
  %458 = vmatpush2.bf16.msra.mxu0 0
  %459 = vmatprep.subr.bf16.mxu0 0
  %460 = vmatpush2.bf16.msra.mxu0 0
  %461 = vmatprep.subr.bf16.mxu0 0
  %462 = vmatpush2.bf16.msra.mxu0 0
  %463 = vmatprep.subr.bf16.mxu0 0
  %464 = vmatpush2.bf16.msra.mxu0 0
  %465 = vmatprep.mubr.bf16.mxu0 0
  %466 = vmatmul.mubr.bf16.gmra.mxu0 %v38
  %v467 = vpop.f32.mrf.mxu0
  %v468 = vadd.f32 0.0, %v467
  %v469 = vpop.f32.mrf.mxu0
  %v470 = vpop.f32.mrf.mxu0
  %v471 = vpop.f32.mrf.mxu0
  %472 = vdwg.mxu0
  %v473 = vmax.f32 %v408, %v468
  %s474 = scalar_lea.vmem %s0, 140
  %v475 = vld [vmem:[%s474] sm:$0xf]
  %v476 = vld [vmem:[%s474 + $0x4] sm:$0xf]
  %v477 = vld [vmem:[%s474 + $0x8] sm:$0xf]
  %v478 = vld [vmem:[%s474 + $0xc] sm:$0xf]
  %v479 = vld [vmem:[%s474 + $0x10] sm:$0x3]
  %v485 = vunpack.c.l.b16 %v475
  %v486 = vunpack.c.l.b16 %v476
  %v487 = vunpack.c.l.b16 %v477
  %v488 = vunpack.c.l.b16 %v478
  %v489 = vunpack.c.l.b16 %v479
  %v490 = vpack.c.b16 %v486, %v485
  %v491 = vpack.c.b16 %v488, %v487
  %v492 = vpack.c.b16 %v489, %v489
  %v496 = vsel %vm40, %v492, 0
  %498 = vmatprep.subr.bf16.mxu0 0
  %499 = vmatpush1.bf16.msra.mxu0 0
  %500 = vmatprep.subr.bf16.mxu0 0
  %501 = vmatpush1.bf16.msra.mxu0 0
  %502 = vmatprep.subr.bf16.mxu0 0
  %503 = vmatpush1.bf16.msra.mxu0 0
  %504 = vmatprep.subr.bf16.mxu0 0
  %505 = vmatpush1.bf16.msra.mxu0 0
  %506 = vmatprep.subr.bf16.mxu0 0
  %507 = vmatpush1.bf16.msra.mxu0 0
  %508 = vmatprep.subr.bf16.mxu0 0
  %509 = vmatpush1.bf16.msra.mxu0 %v496
  %510 = vmatprep.subr.bf16.mxu0 0
  %511 = vmatpush1.bf16.msra.mxu0 %v491
  %512 = vmatprep.subr.bf16.mxu0 0
  %513 = vmatpush1.bf16.msra.mxu0 %v490
  %514 = vmatprep.subr.bf16.mxu0 0
  %515 = vmatpush2.bf16.msra.mxu0 0
  %516 = vmatprep.subr.bf16.mxu0 0
  %517 = vmatpush2.bf16.msra.mxu0 0
  %518 = vmatprep.subr.bf16.mxu0 0
  %519 = vmatpush2.bf16.msra.mxu0 0
  %520 = vmatprep.subr.bf16.mxu0 0
  %521 = vmatpush2.bf16.msra.mxu0 0
  %522 = vmatprep.subr.bf16.mxu0 0
  %523 = vmatpush2.bf16.msra.mxu0 0
  %524 = vmatprep.subr.bf16.mxu0 0
  %525 = vmatpush2.bf16.msra.mxu0 0
  %526 = vmatprep.subr.bf16.mxu0 0
  %527 = vmatpush2.bf16.msra.mxu0 0
  %528 = vmatprep.subr.bf16.mxu0 0
  %529 = vmatpush2.bf16.msra.mxu0 0
  %530 = vmatprep.mubr.bf16.mxu0 0
  %531 = vmatmul.mubr.bf16.gmra.mxu0 %v38
  %v532 = vpop.f32.mrf.mxu0
  %v533 = vadd.f32 0.0, %v532
  %v534 = vpop.f32.mrf.mxu0
  %v535 = vpop.f32.mrf.mxu0
  %v536 = vpop.f32.mrf.mxu0
  %537 = vdwg.mxu0
  %v538 = vmax.f32 %v473, %v533
  %s539 = scalar_lea.vmem %s0, 160
  %v540 = vld [vmem:[%s539] sm:$0xf]
  %v541 = vld [vmem:[%s539 + $0x4] sm:$0xf]
  %v542 = vld [vmem:[%s539 + $0x8] sm:$0xf]
  %v543 = vld [vmem:[%s539 + $0xc] sm:$0xf]
  %v544 = vld [vmem:[%s539 + $0x10] sm:$0x3]
  %v550 = vunpack.c.l.b16 %v540
  %v551 = vunpack.c.l.b16 %v541
  %v552 = vunpack.c.l.b16 %v542
  %v553 = vunpack.c.l.b16 %v543
  %v554 = vunpack.c.l.b16 %v544
  %v555 = vpack.c.b16 %v551, %v550
  %v556 = vpack.c.b16 %v553, %v552
  %v557 = vpack.c.b16 %v554, %v554
  %v561 = vsel %vm40, %v557, 0
  %563 = vmatprep.subr.bf16.mxu0 0
  %564 = vmatpush1.bf16.msra.mxu0 0
  %565 = vmatprep.subr.bf16.mxu0 0
  %566 = vmatpush1.bf16.msra.mxu0 0
  %567 = vmatprep.subr.bf16.mxu0 0
  %568 = vmatpush1.bf16.msra.mxu0 0
  %569 = vmatprep.subr.bf16.mxu0 0
  %570 = vmatpush1.bf16.msra.mxu0 0
  %571 = vmatprep.subr.bf16.mxu0 0
  %572 = vmatpush1.bf16.msra.mxu0 0
  %573 = vmatprep.subr.bf16.mxu0 0
  %574 = vmatpush1.bf16.msra.mxu0 %v561
  %575 = vmatprep.subr.bf16.mxu0 0
  %576 = vmatpush1.bf16.msra.mxu0 %v556
  %577 = vmatprep.subr.bf16.mxu0 0
  %578 = vmatpush1.bf16.msra.mxu0 %v555
  %579 = vmatprep.subr.bf16.mxu0 0
  %580 = vmatpush2.bf16.msra.mxu0 0
  %581 = vmatprep.subr.bf16.mxu0 0
  %582 = vmatpush2.bf16.msra.mxu0 0
  %583 = vmatprep.subr.bf16.mxu0 0
  %584 = vmatpush2.bf16.msra.mxu0 0
  %585 = vmatprep.subr.bf16.mxu0 0
  %586 = vmatpush2.bf16.msra.mxu0 0
  %587 = vmatprep.subr.bf16.mxu0 0
  %588 = vmatpush2.bf16.msra.mxu0 0
  %589 = vmatprep.subr.bf16.mxu0 0
  %590 = vmatpush2.bf16.msra.mxu0 0
  %591 = vmatprep.subr.bf16.mxu0 0
  %592 = vmatpush2.bf16.msra.mxu0 0
  %593 = vmatprep.subr.bf16.mxu0 0
  %594 = vmatpush2.bf16.msra.mxu0 0
  %595 = vmatprep.mubr.bf16.mxu0 0
  %596 = vmatmul.mubr.bf16.gmra.mxu0 %v38
  %v597 = vpop.f32.mrf.mxu0
  %v598 = vadd.f32 0.0, %v597
  %v599 = vpop.f32.mrf.mxu0
  %v600 = vpop.f32.mrf.mxu0
  %v601 = vpop.f32.mrf.mxu0
  %602 = vdwg.mxu0
  %v603 = vmax.f32 %v538, %v598
  %s604 = scalar_lea.vmem %s0, 180
  %v605 = vld [vmem:[%s604] sm:$0xf]
  %v606 = vld [vmem:[%s604 + $0x4] sm:$0xf]
  %v607 = vld [vmem:[%s604 + $0x8] sm:$0xf]
  %v608 = vld [vmem:[%s604 + $0xc] sm:$0xf]
  %v609 = vld [vmem:[%s604 + $0x10] sm:$0x3]
  %v615 = vunpack.c.l.b16 %v605
  %v616 = vunpack.c.l.b16 %v606
  %v617 = vunpack.c.l.b16 %v607
  %v618 = vunpack.c.l.b16 %v608
  %v619 = vunpack.c.l.b16 %v609
  %v620 = vpack.c.b16 %v616, %v615
  %v621 = vpack.c.b16 %v618, %v617
  %v622 = vpack.c.b16 %v619, %v619
  %v626 = vsel %vm40, %v622, 0
  %628 = vmatprep.subr.bf16.mxu0 0
  %629 = vmatpush1.bf16.msra.mxu0 0
  %630 = vmatprep.subr.bf16.mxu0 0
  %631 = vmatpush1.bf16.msra.mxu0 0
  %632 = vmatprep.subr.bf16.mxu0 0
  %633 = vmatpush1.bf16.msra.mxu0 0
  %634 = vmatprep.subr.bf16.mxu0 0
  %635 = vmatpush1.bf16.msra.mxu0 0
  %636 = vmatprep.subr.bf16.mxu0 0
  %637 = vmatpush1.bf16.msra.mxu0 0
  %638 = vmatprep.subr.bf16.mxu0 0
  %639 = vmatpush1.bf16.msra.mxu0 %v626
  %640 = vmatprep.subr.bf16.mxu0 0
  %641 = vmatpush1.bf16.msra.mxu0 %v621
  %642 = vmatprep.subr.bf16.mxu0 0
  %643 = vmatpush1.bf16.msra.mxu0 %v620
  %644 = vmatprep.subr.bf16.mxu0 0
  %645 = vmatpush2.bf16.msra.mxu0 0
  %646 = vmatprep.subr.bf16.mxu0 0
  %647 = vmatpush2.bf16.msra.mxu0 0
  %648 = vmatprep.subr.bf16.mxu0 0
  %649 = vmatpush2.bf16.msra.mxu0 0
  %650 = vmatprep.subr.bf16.mxu0 0
  %651 = vmatpush2.bf16.msra.mxu0 0
  %652 = vmatprep.subr.bf16.mxu0 0
  %653 = vmatpush2.bf16.msra.mxu0 0
  %654 = vmatprep.subr.bf16.mxu0 0
  %655 = vmatpush2.bf16.msra.mxu0 0
  %656 = vmatprep.subr.bf16.mxu0 0
  %657 = vmatpush2.bf16.msra.mxu0 0
  %658 = vmatprep.subr.bf16.mxu0 0
  %659 = vmatpush2.bf16.msra.mxu0 0
  %660 = vmatprep.mubr.bf16.mxu0 0
  %661 = vmatmul.mubr.bf16.gmra.mxu0 %v38
  %v662 = vpop.f32.mrf.mxu0
  %v663 = vadd.f32 0.0, %v662
  %v664 = vpop.f32.mrf.mxu0
  %v665 = vpop.f32.mrf.mxu0
  %v666 = vpop.f32.mrf.mxu0
  %667 = vdwg.mxu0
  %v668 = vmax.f32 %v603, %v663
  %s669 = scalar_lea.vmem %s0, 200
  %v670 = vld [vmem:[%s669] sm:$0xf]
  %v671 = vld [vmem:[%s669 + $0x4] sm:$0xf]
  %v672 = vld [vmem:[%s669 + $0x8] sm:$0xf]
  %v673 = vld [vmem:[%s669 + $0xc] sm:$0xf]
  %v674 = vld [vmem:[%s669 + $0x10] sm:$0x3]
  %v680 = vunpack.c.l.b16 %v670
  %v681 = vunpack.c.l.b16 %v671
  %v682 = vunpack.c.l.b16 %v672
  %v683 = vunpack.c.l.b16 %v673
  %v684 = vunpack.c.l.b16 %v674
  %v685 = vpack.c.b16 %v681, %v680
  %v686 = vpack.c.b16 %v683, %v682
  %v687 = vpack.c.b16 %v684, %v684
  %v691 = vsel %vm40, %v687, 0
  %693 = vmatprep.subr.bf16.mxu0 0
  %694 = vmatpush1.bf16.msra.mxu0 0
  %695 = vmatprep.subr.bf16.mxu0 0
  %696 = vmatpush1.bf16.msra.mxu0 0
  %697 = vmatprep.subr.bf16.mxu0 0
  %698 = vmatpush1.bf16.msra.mxu0 0
  %699 = vmatprep.subr.bf16.mxu0 0
  %700 = vmatpush1.bf16.msra.mxu0 0
  %701 = vmatprep.subr.bf16.mxu0 0
  %702 = vmatpush1.bf16.msra.mxu0 0
  %703 = vmatprep.subr.bf16.mxu0 0
  %704 = vmatpush1.bf16.msra.mxu0 %v691
  %705 = vmatprep.subr.bf16.mxu0 0
  %706 = vmatpush1.bf16.msra.mxu0 %v686
  %707 = vmatprep.subr.bf16.mxu0 0
  %708 = vmatpush1.bf16.msra.mxu0 %v685
  %709 = vmatprep.subr.bf16.mxu0 0
  %710 = vmatpush2.bf16.msra.mxu0 0
  %711 = vmatprep.subr.bf16.mxu0 0
  %712 = vmatpush2.bf16.msra.mxu0 0
  %713 = vmatprep.subr.bf16.mxu0 0
  %714 = vmatpush2.bf16.msra.mxu0 0
  %715 = vmatprep.subr.bf16.mxu0 0
  %716 = vmatpush2.bf16.msra.mxu0 0
  %717 = vmatprep.subr.bf16.mxu0 0
  %718 = vmatpush2.bf16.msra.mxu0 0
  %719 = vmatprep.subr.bf16.mxu0 0
  %720 = vmatpush2.bf16.msra.mxu0 0
  %721 = vmatprep.subr.bf16.mxu0 0
  %722 = vmatpush2.bf16.msra.mxu0 0
  %723 = vmatprep.subr.bf16.mxu0 0
  %724 = vmatpush2.bf16.msra.mxu0 0
  %725 = vmatprep.mubr.bf16.mxu0 0
  %726 = vmatmul.mubr.bf16.gmra.mxu0 %v38
  %v727 = vpop.f32.mrf.mxu0
  %v728 = vadd.f32 0.0, %v727
  %v729 = vpop.f32.mrf.mxu0
  %v730 = vpop.f32.mrf.mxu0
  %v731 = vpop.f32.mrf.mxu0
  %732 = vdwg.mxu0
  %v733 = vmax.f32 %v668, %v728
  %s734 = scalar_lea.vmem %s0, 220
  %v735 = vld [vmem:[%s734] sm:$0xf]
  %v736 = vld [vmem:[%s734 + $0x4] sm:$0xf]
  %v737 = vld [vmem:[%s734 + $0x8] sm:$0xf]
  %v738 = vld [vmem:[%s734 + $0xc] sm:$0xf]
  %v739 = vld [vmem:[%s734 + $0x10] sm:$0x3]
  %v745 = vunpack.c.l.b16 %v735
  %v746 = vunpack.c.l.b16 %v736
  %v747 = vunpack.c.l.b16 %v737
  %v748 = vunpack.c.l.b16 %v738
  %v749 = vunpack.c.l.b16 %v739
  %v750 = vpack.c.b16 %v746, %v745
  %v751 = vpack.c.b16 %v748, %v747
  %v752 = vpack.c.b16 %v749, %v749
  %v756 = vsel %vm40, %v752, 0
  %758 = vmatprep.subr.bf16.mxu0 0
  %759 = vmatpush1.bf16.msra.mxu0 0
  %760 = vmatprep.subr.bf16.mxu0 0
  %761 = vmatpush1.bf16.msra.mxu0 0
  %762 = vmatprep.subr.bf16.mxu0 0
  %763 = vmatpush1.bf16.msra.mxu0 0
  %764 = vmatprep.subr.bf16.mxu0 0
  %765 = vmatpush1.bf16.msra.mxu0 0
  %766 = vmatprep.subr.bf16.mxu0 0
  %767 = vmatpush1.bf16.msra.mxu0 0
  %768 = vmatprep.subr.bf16.mxu0 0
  %769 = vmatpush1.bf16.msra.mxu0 %v756
  %770 = vmatprep.subr.bf16.mxu0 0
  %771 = vmatpush1.bf16.msra.mxu0 %v751
  %772 = vmatprep.subr.bf16.mxu0 0
  %773 = vmatpush1.bf16.msra.mxu0 %v750
  %774 = vmatprep.subr.bf16.mxu0 0
  %775 = vmatpush2.bf16.msra.mxu0 0
  %776 = vmatprep.subr.bf16.mxu0 0
  %777 = vmatpush2.bf16.msra.mxu0 0
  %778 = vmatprep.subr.bf16.mxu0 0
  %779 = vmatpush2.bf16.msra.mxu0 0
  %780 = vmatprep.subr.bf16.mxu0 0
  %781 = vmatpush2.bf16.msra.mxu0 0
  %782 = vmatprep.subr.bf16.mxu0 0
  %783 = vmatpush2.bf16.msra.mxu0 0
  %784 = vmatprep.subr.bf16.mxu0 0
  %785 = vmatpush2.bf16.msra.mxu0 0
  %786 = vmatprep.subr.bf16.mxu0 0
  %787 = vmatpush2.bf16.msra.mxu0 0
  %788 = vmatprep.subr.bf16.mxu0 0
  %789 = vmatpush2.bf16.msra.mxu0 0
  %790 = vmatprep.mubr.bf16.mxu0 0
  %791 = vmatmul.mubr.bf16.gmra.mxu0 %v38
  %v792 = vpop.f32.mrf.mxu0
  %v793 = vadd.f32 0.0, %v792
  %v794 = vpop.f32.mrf.mxu0
  %v795 = vpop.f32.mrf.mxu0
  %v796 = vpop.f32.mrf.mxu0
  %797 = vdwg.mxu0
  %v798 = vmax.f32 %v733, %v793
  %s799 = scalar_lea.vmem %s0, 240
  %v800 = vld [vmem:[%s799] sm:$0xf]
  %v801 = vld [vmem:[%s799 + $0x4] sm:$0xf]
  %v802 = vld [vmem:[%s799 + $0x8] sm:$0xf]
  %v803 = vld [vmem:[%s799 + $0xc] sm:$0xf]
  %v804 = vld [vmem:[%s799 + $0x10] sm:$0x3]
  %v810 = vunpack.c.l.b16 %v800
  %v811 = vunpack.c.l.b16 %v801
  %v812 = vunpack.c.l.b16 %v802
  %v813 = vunpack.c.l.b16 %v803
  %v814 = vunpack.c.l.b16 %v804
  %v815 = vpack.c.b16 %v811, %v810
  %v816 = vpack.c.b16 %v813, %v812
  %v817 = vpack.c.b16 %v814, %v814
  %v821 = vsel %vm40, %v817, 0
  %823 = vmatprep.subr.bf16.mxu0 0
  %824 = vmatpush1.bf16.msra.mxu0 0
  %825 = vmatprep.subr.bf16.mxu0 0
  %826 = vmatpush1.bf16.msra.mxu0 0
  %827 = vmatprep.subr.bf16.mxu0 0
  %828 = vmatpush1.bf16.msra.mxu0 0
  %829 = vmatprep.subr.bf16.mxu0 0
  %830 = vmatpush1.bf16.msra.mxu0 0
  %831 = vmatprep.subr.bf16.mxu0 0
  %832 = vmatpush1.bf16.msra.mxu0 0
  %833 = vmatprep.subr.bf16.mxu0 0
  %834 = vmatpush1.bf16.msra.mxu0 %v821
  %835 = vmatprep.subr.bf16.mxu0 0
  %836 = vmatpush1.bf16.msra.mxu0 %v816
  %837 = vmatprep.subr.bf16.mxu0 0
  %838 = vmatpush1.bf16.msra.mxu0 %v815
  %839 = vmatprep.subr.bf16.mxu0 0
  %840 = vmatpush2.bf16.msra.mxu0 0
  %841 = vmatprep.subr.bf16.mxu0 0
  %842 = vmatpush2.bf16.msra.mxu0 0
  %843 = vmatprep.subr.bf16.mxu0 0
  %844 = vmatpush2.bf16.msra.mxu0 0
  %845 = vmatprep.subr.bf16.mxu0 0
  %846 = vmatpush2.bf16.msra.mxu0 0
  %847 = vmatprep.subr.bf16.mxu0 0
  %848 = vmatpush2.bf16.msra.mxu0 0
  %849 = vmatprep.subr.bf16.mxu0 0
  %850 = vmatpush2.bf16.msra.mxu0 0
  %851 = vmatprep.subr.bf16.mxu0 0
  %852 = vmatpush2.bf16.msra.mxu0 0
  %853 = vmatprep.subr.bf16.mxu0 0
  %854 = vmatpush2.bf16.msra.mxu0 0
  %855 = vmatprep.mubr.bf16.mxu0 0
  %856 = vmatmul.mubr.bf16.gmra.mxu0 %v38
  %v857 = vpop.f32.mrf.mxu0
  %v858 = vadd.f32 0.0, %v857
  %v859 = vpop.f32.mrf.mxu0
  %v860 = vpop.f32.mrf.mxu0
  %v861 = vpop.f32.mrf.mxu0
  %862 = vdwg.mxu0
  %v863 = vmax.f32 %v798, %v858
  %s864 = scalar_lea.vmem %s0, 260
  %v865 = vld [vmem:[%s864] sm:$0xf]
  %v866 = vld [vmem:[%s864 + $0x4] sm:$0xf]
  %v867 = vld [vmem:[%s864 + $0x8] sm:$0xf]
  %v868 = vld [vmem:[%s864 + $0xc] sm:$0xf]
  %v869 = vld [vmem:[%s864 + $0x10] sm:$0x3]
  %v875 = vunpack.c.l.b16 %v865
  %v876 = vunpack.c.l.b16 %v866
  %v877 = vunpack.c.l.b16 %v867
  %v878 = vunpack.c.l.b16 %v868
  %v879 = vunpack.c.l.b16 %v869
  %v880 = vpack.c.b16 %v876, %v875
  %v881 = vpack.c.b16 %v878, %v877
  %v882 = vpack.c.b16 %v879, %v879
  %v886 = vsel %vm40, %v882, 0
  %888 = vmatprep.subr.bf16.mxu0 0
  %889 = vmatpush1.bf16.msra.mxu0 0
  %890 = vmatprep.subr.bf16.mxu0 0
  %891 = vmatpush1.bf16.msra.mxu0 0
  %892 = vmatprep.subr.bf16.mxu0 0
  %893 = vmatpush1.bf16.msra.mxu0 0
  %894 = vmatprep.subr.bf16.mxu0 0
  %895 = vmatpush1.bf16.msra.mxu0 0
  %896 = vmatprep.subr.bf16.mxu0 0
  %897 = vmatpush1.bf16.msra.mxu0 0
  %898 = vmatprep.subr.bf16.mxu0 0
  %899 = vmatpush1.bf16.msra.mxu0 %v886
  %900 = vmatprep.subr.bf16.mxu0 0
  %901 = vmatpush1.bf16.msra.mxu0 %v881
  %902 = vmatprep.subr.bf16.mxu0 0
  %903 = vmatpush1.bf16.msra.mxu0 %v880
  %904 = vmatprep.subr.bf16.mxu0 0
  %905 = vmatpush2.bf16.msra.mxu0 0
  %906 = vmatprep.subr.bf16.mxu0 0
  %907 = vmatpush2.bf16.msra.mxu0 0
  %908 = vmatprep.subr.bf16.mxu0 0
  %909 = vmatpush2.bf16.msra.mxu0 0
  %910 = vmatprep.subr.bf16.mxu0 0
  %911 = vmatpush2.bf16.msra.mxu0 0
  %912 = vmatprep.subr.bf16.mxu0 0
  %913 = vmatpush2.bf16.msra.mxu0 0
  %914 = vmatprep.subr.bf16.mxu0 0
  %915 = vmatpush2.bf16.msra.mxu0 0
  %916 = vmatprep.subr.bf16.mxu0 0
  %917 = vmatpush2.bf16.msra.mxu0 0
  %918 = vmatprep.subr.bf16.mxu0 0
  %919 = vmatpush2.bf16.msra.mxu0 0
  %920 = vmatprep.mubr.bf16.mxu0 0
  %921 = vmatmul.mubr.bf16.gmra.mxu0 %v38
  %v922 = vpop.f32.mrf.mxu0
  %v923 = vadd.f32 0.0, %v922
  %v924 = vpop.f32.mrf.mxu0
  %v925 = vpop.f32.mrf.mxu0
  %v926 = vpop.f32.mrf.mxu0
  %927 = vdwg.mxu0
  %v928 = vmax.f32 %v863, %v923
  %s929 = scalar_lea.vmem %s0, 280
  %v930 = vld [vmem:[%s929] sm:$0xf]
  %v931 = vld [vmem:[%s929 + $0x4] sm:$0xf]
  %v932 = vld [vmem:[%s929 + $0x8] sm:$0xf]
  %v933 = vld [vmem:[%s929 + $0xc] sm:$0xf]
  %v934 = vld [vmem:[%s929 + $0x10] sm:$0x3]
  %v940 = vunpack.c.l.b16 %v930
  %v941 = vunpack.c.l.b16 %v931
  %v942 = vunpack.c.l.b16 %v932
  %v943 = vunpack.c.l.b16 %v933
  %v944 = vunpack.c.l.b16 %v934
  %v945 = vpack.c.b16 %v941, %v940
  %v946 = vpack.c.b16 %v943, %v942
  %v947 = vpack.c.b16 %v944, %v944
  %v951 = vsel %vm40, %v947, 0
  %953 = vmatprep.subr.bf16.mxu0 0
  %954 = vmatpush1.bf16.msra.mxu0 0
  %955 = vmatprep.subr.bf16.mxu0 0
  %956 = vmatpush1.bf16.msra.mxu0 0
  %957 = vmatprep.subr.bf16.mxu0 0
  %958 = vmatpush1.bf16.msra.mxu0 0
  %959 = vmatprep.subr.bf16.mxu0 0
  %960 = vmatpush1.bf16.msra.mxu0 0
  %961 = vmatprep.subr.bf16.mxu0 0
  %962 = vmatpush1.bf16.msra.mxu0 0
  %963 = vmatprep.subr.bf16.mxu0 0
  %964 = vmatpush1.bf16.msra.mxu0 %v951
  %965 = vmatprep.subr.bf16.mxu0 0
  %966 = vmatpush1.bf16.msra.mxu0 %v946
  %967 = vmatprep.subr.bf16.mxu0 0
  %968 = vmatpush1.bf16.msra.mxu0 %v945
  %969 = vmatprep.subr.bf16.mxu0 0
  %970 = vmatpush2.bf16.msra.mxu0 0
  %971 = vmatprep.subr.bf16.mxu0 0
  %972 = vmatpush2.bf16.msra.mxu0 0
  %973 = vmatprep.subr.bf16.mxu0 0
  %974 = vmatpush2.bf16.msra.mxu0 0
  %975 = vmatprep.subr.bf16.mxu0 0
  %976 = vmatpush2.bf16.msra.mxu0 0
  %977 = vmatprep.subr.bf16.mxu0 0
  %978 = vmatpush2.bf16.msra.mxu0 0
  %979 = vmatprep.subr.bf16.mxu0 0
  %980 = vmatpush2.bf16.msra.mxu0 0
  %981 = vmatprep.subr.bf16.mxu0 0
  %982 = vmatpush2.bf16.msra.mxu0 0
  %983 = vmatprep.subr.bf16.mxu0 0
  %984 = vmatpush2.bf16.msra.mxu0 0
  %985 = vmatprep.mubr.bf16.mxu0 0
  %986 = vmatmul.mubr.bf16.gmra.mxu0 %v38
  %v987 = vpop.f32.mrf.mxu0
  %v988 = vadd.f32 0.0, %v987
  %v989 = vpop.f32.mrf.mxu0
  %v990 = vpop.f32.mrf.mxu0
  %v991 = vpop.f32.mrf.mxu0
  %992 = vdwg.mxu0
  %v993 = vmax.f32 %v928, %v988
  %s994 = scalar_lea.vmem %s0, 300
  %v995 = vld [vmem:[%s994] sm:$0xf]
  %v996 = vld [vmem:[%s994 + $0x4] sm:$0xf]
  %v997 = vld [vmem:[%s994 + $0x8] sm:$0xf]
  %v998 = vld [vmem:[%s994 + $0xc] sm:$0xf]
  %v999 = vld [vmem:[%s994 + $0x10] sm:$0x3]
  %v1005 = vunpack.c.l.b16 %v995
  %v1006 = vunpack.c.l.b16 %v996
  %v1007 = vunpack.c.l.b16 %v997
  %v1008 = vunpack.c.l.b16 %v998
  %v1009 = vunpack.c.l.b16 %v999
  %v1010 = vpack.c.b16 %v1006, %v1005
  %v1011 = vpack.c.b16 %v1008, %v1007
  %v1012 = vpack.c.b16 %v1009, %v1009
  %v1016 = vsel %vm40, %v1012, 0
  %1018 = vmatprep.subr.bf16.mxu0 0
  %1019 = vmatpush1.bf16.msra.mxu0 0
  %1020 = vmatprep.subr.bf16.mxu0 0
  %1021 = vmatpush1.bf16.msra.mxu0 0
  %1022 = vmatprep.subr.bf16.mxu0 0
  %1023 = vmatpush1.bf16.msra.mxu0 0
  %1024 = vmatprep.subr.bf16.mxu0 0
  %1025 = vmatpush1.bf16.msra.mxu0 0
  %1026 = vmatprep.subr.bf16.mxu0 0
  %1027 = vmatpush1.bf16.msra.mxu0 0
  %1028 = vmatprep.subr.bf16.mxu0 0
  %1029 = vmatpush1.bf16.msra.mxu0 %v1016
  %1030 = vmatprep.subr.bf16.mxu0 0
  %1031 = vmatpush1.bf16.msra.mxu0 %v1011
  %1032 = vmatprep.subr.bf16.mxu0 0
  %1033 = vmatpush1.bf16.msra.mxu0 %v1010
  %1034 = vmatprep.subr.bf16.mxu0 0
  %1035 = vmatpush2.bf16.msra.mxu0 0
  %1036 = vmatprep.subr.bf16.mxu0 0
  %1037 = vmatpush2.bf16.msra.mxu0 0
  %1038 = vmatprep.subr.bf16.mxu0 0
  %1039 = vmatpush2.bf16.msra.mxu0 0
  %1040 = vmatprep.subr.bf16.mxu0 0
  %1041 = vmatpush2.bf16.msra.mxu0 0
  %1042 = vmatprep.subr.bf16.mxu0 0
  %1043 = vmatpush2.bf16.msra.mxu0 0
  %1044 = vmatprep.subr.bf16.mxu0 0
  %1045 = vmatpush2.bf16.msra.mxu0 0
  %1046 = vmatprep.subr.bf16.mxu0 0
  %1047 = vmatpush2.bf16.msra.mxu0 0
  %1048 = vmatprep.subr.bf16.mxu0 0
  %1049 = vmatpush2.bf16.msra.mxu0 0
  %1050 = vmatprep.mubr.bf16.mxu0 0
  %1051 = vmatmul.mubr.bf16.gmra.mxu0 %v38
  %v1052 = vpop.f32.mrf.mxu0
  %v1053 = vadd.f32 0.0, %v1052
  %v1054 = vpop.f32.mrf.mxu0
  %v1055 = vpop.f32.mrf.mxu0
  %v1056 = vpop.f32.mrf.mxu0
  %1057 = vdwg.mxu0
  %v1058 = vmax.f32 %v993, %v1053
  %v1059 = vld [vmem:[%s2] sm:$0xf]
  %1061 = vset.pattern.permute.xlu0 0
  %1062 = vperm.xlu0 %1061, %v1059
  %v1063 = vpop.permute.xlu0 %1062
  %v1065 = vadd.f32 %v1058, %v1063
  %v1066 = vmax.f32 %v1065, 0.0
  %vm1067 = vcmask 257024
  %1068 = vst.msk [vmem:[%s3] sm:$0xf] %vm1067, %v1066
  // Predicated region
  $region14: #{residual_network_forward.2} parent=0 // pred_check
    _
  $region15: #{residual_network_forward.2} parent=0 // pred_check_branch
    %1070 = sbr.rel (0) target = $region17
  $region16: #{residual_network_forward.2} parent=0 // pred_region
    _
  $region17: #{residual_network_forward.2} parent=0 // pred_fallthru
    _
  // Predicated region
  $region18: #{residual_network_forward.2} parent=0 // pred_check
    _
  $region19: #{residual_network_forward.2} parent=0 // pred_check_branch
    %1072 = sbr.rel (0) target = $region21
  $region20: #{residual_network_forward.2} parent=0 // pred_region
    _
  $region21: #{residual_network_forward.2} parent=0 // pred_fallthru
    _

// kernel: residual_network_forward.3
$region0: #{residual_network_forward.3}
  #allocation0 [shape = 'u32[]', space=smem, size = 0x4, offset = 0x4, fixed_abs, tag = 'smem constant byte address 0x4 - core index']
  #allocation1 [shape = 'u32[144,128]{1,0:T(1,128)}', space=vmem, size = 0x12000, scoped, tag = 'internal scratch']
  %s0 = inlined_call_operand.vmem [shape: bf16[16,36,2], index: 0, kind: input, shape index: {}]
  %s1 = inlined_call_operand.vmem [shape: bf16[4,36], index: 1, kind: input, shape index: {}]
  %s2 = inlined_call_operand.vmem [shape: f32[4,1], index: 2, kind: input, shape index: {}]
  %s3 = inlined_call_operand.vmem [shape: f32[4,2], index: 3, kind: output, shape index: {}]
  %s4 = sld [smem:[#allocation0]]
  $region22: #{residual_network_forward.3} parent=0
    _
  %s6 = ssub.s32 1, %s4
  %s7 = scalar_select 0, %s6, %s4
  // Predicated region
  $region2: #{residual_network_forward.3} parent=0 // pred_check
    _
  $region3: #{residual_network_forward.3} parent=0 // pred_check_branch
    %9 = sbr.rel (0) target = $region5
  $region4: #{residual_network_forward.3} parent=0 // pred_region
    _
  $region5: #{residual_network_forward.3} parent=0 // pred_fallthru
    _
  // Predicated region
  $region6: #{residual_network_forward.3} parent=0 // pred_check
    _
  $region7: #{residual_network_forward.3} parent=0 // pred_check_branch
    %11 = sbr.rel (0) target = $region9
  $region8: #{residual_network_forward.3} parent=0 // pred_region
    _
  $region9: #{residual_network_forward.3} parent=0 // pred_fallthru
    _
  // Predicated region
  $region10: #{residual_network_forward.3} parent=0 // pred_check
    _
  $region11: #{residual_network_forward.3} parent=0 // pred_check_branch
    %13 = sbr.rel (0) target = $region13
  $region12: #{residual_network_forward.3} parent=0 // pred_region
    _
  $region13: #{residual_network_forward.3} parent=0 // pred_fallthru
    _
  %v15 = vld [vmem:[%s1] sm:$0x3]
  %v16 = vld [vmem:[%s0] sm:$0xf]
  %v17 = vld [vmem:[%s0 + $0x4] sm:$0xf]
  %v18 = vld [vmem:[%s0 + $0x8] sm:$0xf]
  %v19 = vld [vmem:[%s0 + $0xc] sm:$0xf]
  %v20 = vld [vmem:[%s0 + $0x10] sm:$0x3]
  %v26 = vunpack.c.l.b16 %v16
  %v27 = vunpack.c.l.b16 %v17
  %v28 = vunpack.c.l.b16 %v18
  %v29 = vunpack.c.l.b16 %v19
  %v30 = vunpack.c.l.b16 %v20
  %v31 = vpack.c.b16 %v27, %v26
  %v32 = vpack.c.b16 %v29, %v28
  %v33 = vpack.c.b16 %v30, %v30
  %vm36 = vcmask 293888
  %v38 = vsel %vm36, %v15, 0
  %vm40 = vcmask 1041408
  %v42 = vsel %vm40, %v33, 0
  %44 = vmatprep.subr.bf16.mxu0 0
  %45 = vmatpush1.bf16.msra.mxu0 0
  %46 = vmatprep.subr.bf16.mxu0 0
  %47 = vmatpush1.bf16.msra.mxu0 0
  %48 = vmatprep.subr.bf16.mxu0 0
  %49 = vmatpush1.bf16.msra.mxu0 0
  %50 = vmatprep.subr.bf16.mxu0 0
  %51 = vmatpush1.bf16.msra.mxu0 0
  %52 = vmatprep.subr.bf16.mxu0 0
  %53 = vmatpush1.bf16.msra.mxu0 0
  %54 = vmatprep.subr.bf16.mxu0 0
  %55 = vmatpush1.bf16.msra.mxu0 %v42
  %56 = vmatprep.subr.bf16.mxu0 0
  %57 = vmatpush1.bf16.msra.mxu0 %v32
  %58 = vmatprep.subr.bf16.mxu0 0
  %59 = vmatpush1.bf16.msra.mxu0 %v31
  %60 = vmatprep.subr.bf16.mxu0 0
  %61 = vmatpush2.bf16.msra.mxu0 0
  %62 = vmatprep.subr.bf16.mxu0 0
  %63 = vmatpush2.bf16.msra.mxu0 0
  %64 = vmatprep.subr.bf16.mxu0 0
  %65 = vmatpush2.bf16.msra.mxu0 0
  %66 = vmatprep.subr.bf16.mxu0 0
  %67 = vmatpush2.bf16.msra.mxu0 0
  %68 = vmatprep.subr.bf16.mxu0 0
  %69 = vmatpush2.bf16.msra.mxu0 0
  %70 = vmatprep.subr.bf16.mxu0 0
  %71 = vmatpush2.bf16.msra.mxu0 0
  %72 = vmatprep.subr.bf16.mxu0 0
  %73 = vmatpush2.bf16.msra.mxu0 0
  %74 = vmatprep.subr.bf16.mxu0 0
  %75 = vmatpush2.bf16.msra.mxu0 0
  %76 = vmatprep.mubr.bf16.mxu0 0
  %77 = vmatmul.mubr.bf16.gmra.mxu0 %v38
  %v78 = vpop.f32.mrf.mxu0
  %v79 = vadd.f32 0.0, %v78
  %v80 = vpop.f32.mrf.mxu0
  %v81 = vpop.f32.mrf.mxu0
  %v82 = vpop.f32.mrf.mxu0
  %83 = vdwg.mxu0
  %s84 = scalar_lea.vmem %s0, 20
  %v85 = vld [vmem:[%s84] sm:$0xf]
  %v86 = vld [vmem:[%s84 + $0x4] sm:$0xf]
  %v87 = vld [vmem:[%s84 + $0x8] sm:$0xf]
  %v88 = vld [vmem:[%s84 + $0xc] sm:$0xf]
  %v89 = vld [vmem:[%s84 + $0x10] sm:$0x3]
  %v95 = vunpack.c.l.b16 %v85
  %v96 = vunpack.c.l.b16 %v86
  %v97 = vunpack.c.l.b16 %v87
  %v98 = vunpack.c.l.b16 %v88
  %v99 = vunpack.c.l.b16 %v89
  %v100 = vpack.c.b16 %v96, %v95
  %v101 = vpack.c.b16 %v98, %v97
  %v102 = vpack.c.b16 %v99, %v99
  %v106 = vsel %vm40, %v102, 0
  %108 = vmatprep.subr.bf16.mxu0 0
  %109 = vmatpush1.bf16.msra.mxu0 0
  %110 = vmatprep.subr.bf16.mxu0 0
  %111 = vmatpush1.bf16.msra.mxu0 0
  %112 = vmatprep.subr.bf16.mxu0 0
  %113 = vmatpush1.bf16.msra.mxu0 0
  %114 = vmatprep.subr.bf16.mxu0 0
  %115 = vmatpush1.bf16.msra.mxu0 0
  %116 = vmatprep.subr.bf16.mxu0 0
  %117 = vmatpush1.bf16.msra.mxu0 0
  %118 = vmatprep.subr.bf16.mxu0 0
  %119 = vmatpush1.bf16.msra.mxu0 %v106
  %120 = vmatprep.subr.bf16.mxu0 0
  %121 = vmatpush1.bf16.msra.mxu0 %v101
  %122 = vmatprep.subr.bf16.mxu0 0
  %123 = vmatpush1.bf16.msra.mxu0 %v100
  %124 = vmatprep.subr.bf16.mxu0 0
  %125 = vmatpush2.bf16.msra.mxu0 0
  %126 = vmatprep.subr.bf16.mxu0 0
  %127 = vmatpush2.bf16.msra.mxu0 0
  %128 = vmatprep.subr.bf16.mxu0 0
  %129 = vmatpush2.bf16.msra.mxu0 0
  %130 = vmatprep.subr.bf16.mxu0 0
  %131 = vmatpush2.bf16.msra.mxu0 0
  %132 = vmatprep.subr.bf16.mxu0 0
  %133 = vmatpush2.bf16.msra.mxu0 0
  %134 = vmatprep.subr.bf16.mxu0 0
  %135 = vmatpush2.bf16.msra.mxu0 0
  %136 = vmatprep.subr.bf16.mxu0 0
  %137 = vmatpush2.bf16.msra.mxu0 0
  %138 = vmatprep.subr.bf16.mxu0 0
  %139 = vmatpush2.bf16.msra.mxu0 0
  %140 = vmatprep.mubr.bf16.mxu0 0
  %141 = vmatmul.mubr.bf16.gmra.mxu0 %v38
  %v142 = vpop.f32.mrf.mxu0
  %v143 = vadd.f32 0.0, %v142
  %v144 = vpop.f32.mrf.mxu0
  %v145 = vpop.f32.mrf.mxu0
  %v146 = vpop.f32.mrf.mxu0
  %147 = vdwg.mxu0
  %v148 = vmax.f32 %v79, %v143
  %s149 = scalar_lea.vmem %s0, 40
  %v150 = vld [vmem:[%s149] sm:$0xf]
  %v151 = vld [vmem:[%s149 + $0x4] sm:$0xf]
  %v152 = vld [vmem:[%s149 + $0x8] sm:$0xf]
  %v153 = vld [vmem:[%s149 + $0xc] sm:$0xf]
  %v154 = vld [vmem:[%s149 + $0x10] sm:$0x3]
  %v160 = vunpack.c.l.b16 %v150
  %v161 = vunpack.c.l.b16 %v151
  %v162 = vunpack.c.l.b16 %v152
  %v163 = vunpack.c.l.b16 %v153
  %v164 = vunpack.c.l.b16 %v154
  %v165 = vpack.c.b16 %v161, %v160
  %v166 = vpack.c.b16 %v163, %v162
  %v167 = vpack.c.b16 %v164, %v164
  %v171 = vsel %vm40, %v167, 0
  %173 = vmatprep.subr.bf16.mxu0 0
  %174 = vmatpush1.bf16.msra.mxu0 0
  %175 = vmatprep.subr.bf16.mxu0 0
  %176 = vmatpush1.bf16.msra.mxu0 0
  %177 = vmatprep.subr.bf16.mxu0 0
  %178 = vmatpush1.bf16.msra.mxu0 0
  %179 = vmatprep.subr.bf16.mxu0 0
  %180 = vmatpush1.bf16.msra.mxu0 0
  %181 = vmatprep.subr.bf16.mxu0 0
  %182 = vmatpush1.bf16.msra.mxu0 0
  %183 = vmatprep.subr.bf16.mxu0 0
  %184 = vmatpush1.bf16.msra.mxu0 %v171
  %185 = vmatprep.subr.bf16.mxu0 0
  %186 = vmatpush1.bf16.msra.mxu0 %v166
  %187 = vmatprep.subr.bf16.mxu0 0
  %188 = vmatpush1.bf16.msra.mxu0 %v165
  %189 = vmatprep.subr.bf16.mxu0 0
  %190 = vmatpush2.bf16.msra.mxu0 0
  %191 = vmatprep.subr.bf16.mxu0 0
  %192 = vmatpush2.bf16.msra.mxu0 0
  %193 = vmatprep.subr.bf16.mxu0 0
  %194 = vmatpush2.bf16.msra.mxu0 0
  %195 = vmatprep.subr.bf16.mxu0 0
  %196 = vmatpush2.bf16.msra.mxu0 0
  %197 = vmatprep.subr.bf16.mxu0 0
  %198 = vmatpush2.bf16.msra.mxu0 0
  %199 = vmatprep.subr.bf16.mxu0 0
  %200 = vmatpush2.bf16.msra.mxu0 0
  %201 = vmatprep.subr.bf16.mxu0 0
  %202 = vmatpush2.bf16.msra.mxu0 0
  %203 = vmatprep.subr.bf16.mxu0 0
  %204 = vmatpush2.bf16.msra.mxu0 0
  %205 = vmatprep.mubr.bf16.mxu0 0
  %206 = vmatmul.mubr.bf16.gmra.mxu0 %v38
  %v207 = vpop.f32.mrf.mxu0
  %v208 = vadd.f32 0.0, %v207
  %v209 = vpop.f32.mrf.mxu0
  %v210 = vpop.f32.mrf.mxu0
  %v211 = vpop.f32.mrf.mxu0
  %212 = vdwg.mxu0
  %v213 = vmax.f32 %v148, %v208
  %s214 = scalar_lea.vmem %s0, 60
  %v215 = vld [vmem:[%s214] sm:$0xf]
  %v216 = vld [vmem:[%s214 + $0x4] sm:$0xf]
  %v217 = vld [vmem:[%s214 + $0x8] sm:$0xf]
  %v218 = vld [vmem:[%s214 + $0xc] sm:$0xf]
  %v219 = vld [vmem:[%s214 + $0x10] sm:$0x3]
  %v225 = vunpack.c.l.b16 %v215
  %v226 = vunpack.c.l.b16 %v216
  %v227 = vunpack.c.l.b16 %v217
  %v228 = vunpack.c.l.b16 %v218
  %v229 = vunpack.c.l.b16 %v219
  %v230 = vpack.c.b16 %v226, %v225
  %v231 = vpack.c.b16 %v228, %v227
  %v232 = vpack.c.b16 %v229, %v229
  %v236 = vsel %vm40, %v232, 0
  %238 = vmatprep.subr.bf16.mxu0 0
  %239 = vmatpush1.bf16.msra.mxu0 0
  %240 = vmatprep.subr.bf16.mxu0 0
  %241 = vmatpush1.bf16.msra.mxu0 0
  %242 = vmatprep.subr.bf16.mxu0 0
  %243 = vmatpush1.bf16.msra.mxu0 0
  %244 = vmatprep.subr.bf16.mxu0 0
  %245 = vmatpush1.bf16.msra.mxu0 0
  %246 = vmatprep.subr.bf16.mxu0 0
  %247 = vmatpush1.bf16.msra.mxu0 0
  %248 = vmatprep.subr.bf16.mxu0 0
  %249 = vmatpush1.bf16.msra.mxu0 %v236
  %250 = vmatprep.subr.bf16.mxu0 0
  %251 = vmatpush1.bf16.msra.mxu0 %v231
  %252 = vmatprep.subr.bf16.mxu0 0
  %253 = vmatpush1.bf16.msra.mxu0 %v230
  %254 = vmatprep.subr.bf16.mxu0 0
  %255 = vmatpush2.bf16.msra.mxu0 0
  %256 = vmatprep.subr.bf16.mxu0 0
  %257 = vmatpush2.bf16.msra.mxu0 0
  %258 = vmatprep.subr.bf16.mxu0 0
  %259 = vmatpush2.bf16.msra.mxu0 0
  %260 = vmatprep.subr.bf16.mxu0 0
  %261 = vmatpush2.bf16.msra.mxu0 0
  %262 = vmatprep.subr.bf16.mxu0 0
  %263 = vmatpush2.bf16.msra.mxu0 0
  %264 = vmatprep.subr.bf16.mxu0 0
  %265 = vmatpush2.bf16.msra.mxu0 0
  %266 = vmatprep.subr.bf16.mxu0 0
  %267 = vmatpush2.bf16.msra.mxu0 0
  %268 = vmatprep.subr.bf16.mxu0 0
  %269 = vmatpush2.bf16.msra.mxu0 0
  %270 = vmatprep.mubr.bf16.mxu0 0
  %271 = vmatmul.mubr.bf16.gmra.mxu0 %v38
  %v272 = vpop.f32.mrf.mxu0
  %v273 = vadd.f32 0.0, %v272
  %v274 = vpop.f32.mrf.mxu0
  %v275 = vpop.f32.mrf.mxu0
  %v276 = vpop.f32.mrf.mxu0
  %277 = vdwg.mxu0
  %v278 = vmax.f32 %v213, %v273
  %s279 = scalar_lea.vmem %s0, 80
  %v280 = vld [vmem:[%s279] sm:$0xf]
  %v281 = vld [vmem:[%s279 + $0x4] sm:$0xf]
  %v282 = vld [vmem:[%s279 + $0x8] sm:$0xf]
  %v283 = vld [vmem:[%s279 + $0xc] sm:$0xf]
  %v284 = vld [vmem:[%s279 + $0x10] sm:$0x3]
  %v290 = vunpack.c.l.b16 %v280
  %v291 = vunpack.c.l.b16 %v281
  %v292 = vunpack.c.l.b16 %v282
  %v293 = vunpack.c.l.b16 %v283
  %v294 = vunpack.c.l.b16 %v284
  %v295 = vpack.c.b16 %v291, %v290
  %v296 = vpack.c.b16 %v293, %v292
  %v297 = vpack.c.b16 %v294, %v294
  %v301 = vsel %vm40, %v297, 0
  %303 = vmatprep.subr.bf16.mxu0 0
  %304 = vmatpush1.bf16.msra.mxu0 0
  %305 = vmatprep.subr.bf16.mxu0 0
  %306 = vmatpush1.bf16.msra.mxu0 0
  %307 = vmatprep.subr.bf16.mxu0 0
  %308 = vmatpush1.bf16.msra.mxu0 0
  %309 = vmatprep.subr.bf16.mxu0 0
  %310 = vmatpush1.bf16.msra.mxu0 0
  %311 = vmatprep.subr.bf16.mxu0 0
  %312 = vmatpush1.bf16.msra.mxu0 0
  %313 = vmatprep.subr.bf16.mxu0 0
  %314 = vmatpush1.bf16.msra.mxu0 %v301
  %315 = vmatprep.subr.bf16.mxu0 0
  %316 = vmatpush1.bf16.msra.mxu0 %v296
  %317 = vmatprep.subr.bf16.mxu0 0
  %318 = vmatpush1.bf16.msra.mxu0 %v295
  %319 = vmatprep.subr.bf16.mxu0 0
  %320 = vmatpush2.bf16.msra.mxu0 0
  %321 = vmatprep.subr.bf16.mxu0 0
  %322 = vmatpush2.bf16.msra.mxu0 0
  %323 = vmatprep.subr.bf16.mxu0 0
  %324 = vmatpush2.bf16.msra.mxu0 0
  %325 = vmatprep.subr.bf16.mxu0 0
  %326 = vmatpush2.bf16.msra.mxu0 0
  %327 = vmatprep.subr.bf16.mxu0 0
  %328 = vmatpush2.bf16.msra.mxu0 0
  %329 = vmatprep.subr.bf16.mxu0 0
  %330 = vmatpush2.bf16.msra.mxu0 0
  %331 = vmatprep.subr.bf16.mxu0 0
  %332 = vmatpush2.bf16.msra.mxu0 0
  %333 = vmatprep.subr.bf16.mxu0 0
  %334 = vmatpush2.bf16.msra.mxu0 0
  %335 = vmatprep.mubr.bf16.mxu0 0
  %336 = vmatmul.mubr.bf16.gmra.mxu0 %v38
  %v337 = vpop.f32.mrf.mxu0
  %v338 = vadd.f32 0.0, %v337
  %v339 = vpop.f32.mrf.mxu0
  %v340 = vpop.f32.mrf.mxu0
  %v341 = vpop.f32.mrf.mxu0
  %342 = vdwg.mxu0
  %v343 = vmax.f32 %v278, %v338
  %s344 = scalar_lea.vmem %s0, 100
  %v345 = vld [vmem:[%s344] sm:$0xf]
  %v346 = vld [vmem:[%s344 + $0x4] sm:$0xf]
  %v347 = vld [vmem:[%s344 + $0x8] sm:$0xf]
  %v348 = vld [vmem:[%s344 + $0xc] sm:$0xf]
  %v349 = vld [vmem:[%s344 + $0x10] sm:$0x3]
  %v355 = vunpack.c.l.b16 %v345
  %v356 = vunpack.c.l.b16 %v346
  %v357 = vunpack.c.l.b16 %v347
  %v358 = vunpack.c.l.b16 %v348
  %v359 = vunpack.c.l.b16 %v349
  %v360 = vpack.c.b16 %v356, %v355
  %v361 = vpack.c.b16 %v358, %v357
  %v362 = vpack.c.b16 %v359, %v359
  %v366 = vsel %vm40, %v362, 0
  %368 = vmatprep.subr.bf16.mxu0 0
  %369 = vmatpush1.bf16.msra.mxu0 0
  %370 = vmatprep.subr.bf16.mxu0 0
  %371 = vmatpush1.bf16.msra.mxu0 0
  %372 = vmatprep.subr.bf16.mxu0 0
  %373 = vmatpush1.bf16.msra.mxu0 0
  %374 = vmatprep.subr.bf16.mxu0 0
  %375 = vmatpush1.bf16.msra.mxu0 0
  %376 = vmatprep.subr.bf16.mxu0 0
  %377 = vmatpush1.bf16.msra.mxu0 0
  %378 = vmatprep.subr.bf16.mxu0 0
  %379 = vmatpush1.bf16.msra.mxu0 %v366
  %380 = vmatprep.subr.bf16.mxu0 0
  %381 = vmatpush1.bf16.msra.mxu0 %v361
  %382 = vmatprep.subr.bf16.mxu0 0
  %383 = vmatpush1.bf16.msra.mxu0 %v360
  %384 = vmatprep.subr.bf16.mxu0 0
  %385 = vmatpush2.bf16.msra.mxu0 0
  %386 = vmatprep.subr.bf16.mxu0 0
  %387 = vmatpush2.bf16.msra.mxu0 0
  %388 = vmatprep.subr.bf16.mxu0 0
  %389 = vmatpush2.bf16.msra.mxu0 0
  %390 = vmatprep.subr.bf16.mxu0 0
  %391 = vmatpush2.bf16.msra.mxu0 0
  %392 = vmatprep.subr.bf16.mxu0 0
  %393 = vmatpush2.bf16.msra.mxu0 0
  %394 = vmatprep.subr.bf16.mxu0 0
  %395 = vmatpush2.bf16.msra.mxu0 0
  %396 = vmatprep.subr.bf16.mxu0 0
  %397 = vmatpush2.bf16.msra.mxu0 0
  %398 = vmatprep.subr.bf16.mxu0 0
  %399 = vmatpush2.bf16.msra.mxu0 0
  %400 = vmatprep.mubr.bf16.mxu0 0
  %401 = vmatmul.mubr.bf16.gmra.mxu0 %v38
  %v402 = vpop.f32.mrf.mxu0
  %v403 = vadd.f32 0.0, %v402
  %v404 = vpop.f32.mrf.mxu0
  %v405 = vpop.f32.mrf.mxu0
  %v406 = vpop.f32.mrf.mxu0
  %407 = vdwg.mxu0
  %v408 = vmax.f32 %v343, %v403
  %s409 = scalar_lea.vmem %s0, 120
  %v410 = vld [vmem:[%s409] sm:$0xf]
  %v411 = vld [vmem:[%s409 + $0x4] sm:$0xf]
  %v412 = vld [vmem:[%s409 + $0x8] sm:$0xf]
  %v413 = vld [vmem:[%s409 + $0xc] sm:$0xf]
  %v414 = vld [vmem:[%s409 + $0x10] sm:$0x3]
  %v420 = vunpack.c.l.b16 %v410
  %v421 = vunpack.c.l.b16 %v411
  %v422 = vunpack.c.l.b16 %v412
  %v423 = vunpack.c.l.b16 %v413
  %v424 = vunpack.c.l.b16 %v414
  %v425 = vpack.c.b16 %v421, %v420
  %v426 = vpack.c.b16 %v423, %v422
  %v427 = vpack.c.b16 %v424, %v424
  %v431 = vsel %vm40, %v427, 0
  %433 = vmatprep.subr.bf16.mxu0 0
  %434 = vmatpush1.bf16.msra.mxu0 0
  %435 = vmatprep.subr.bf16.mxu0 0
  %436 = vmatpush1.bf16.msra.mxu0 0
  %437 = vmatprep.subr.bf16.mxu0 0
  %438 = vmatpush1.bf16.msra.mxu0 0
  %439 = vmatprep.subr.bf16.mxu0 0
  %440 = vmatpush1.bf16.msra.mxu0 0
  %441 = vmatprep.subr.bf16.mxu0 0
  %442 = vmatpush1.bf16.msra.mxu0 0
  %443 = vmatprep.subr.bf16.mxu0 0
  %444 = vmatpush1.bf16.msra.mxu0 %v431
  %445 = vmatprep.subr.bf16.mxu0 0
  %446 = vmatpush1.bf16.msra.mxu0 %v426
  %447 = vmatprep.subr.bf16.mxu0 0
  %448 = vmatpush1.bf16.msra.mxu0 %v425
  %449 = vmatprep.subr.bf16.mxu0 0
  %450 = vmatpush2.bf16.msra.mxu0 0
  %451 = vmatprep.subr.bf16.mxu0 0
  %452 = vmatpush2.bf16.msra.mxu0 0
  %453 = vmatprep.subr.bf16.mxu0 0
  %454 = vmatpush2.bf16.msra.mxu0 0
  %455 = vmatprep.subr.bf16.mxu0 0
  %456 = vmatpush2.bf16.msra.mxu0 0
  %457 = vmatprep.subr.bf16.mxu0 0
  %458 = vmatpush2.bf16.msra.mxu0 0
  %459 = vmatprep.subr.bf16.mxu0 0
  %460 = vmatpush2.bf16.msra.mxu0 0
  %461 = vmatprep.subr.bf16.mxu0 0
  %462 = vmatpush2.bf16.msra.mxu0 0
  %463 = vmatprep.subr.bf16.mxu0 0
  %464 = vmatpush2.bf16.msra.mxu0 0
  %465 = vmatprep.mubr.bf16.mxu0 0
  %466 = vmatmul.mubr.bf16.gmra.mxu0 %v38
  %v467 = vpop.f32.mrf.mxu0
  %v468 = vadd.f32 0.0, %v467
  %v469 = vpop.f32.mrf.mxu0
  %v470 = vpop.f32.mrf.mxu0
  %v471 = vpop.f32.mrf.mxu0
  %472 = vdwg.mxu0
  %v473 = vmax.f32 %v408, %v468
  %s474 = scalar_lea.vmem %s0, 140
  %v475 = vld [vmem:[%s474] sm:$0xf]
  %v476 = vld [vmem:[%s474 + $0x4] sm:$0xf]
  %v477 = vld [vmem:[%s474 + $0x8] sm:$0xf]
  %v478 = vld [vmem:[%s474 + $0xc] sm:$0xf]
  %v479 = vld [vmem:[%s474 + $0x10] sm:$0x3]
  %v485 = vunpack.c.l.b16 %v475
  %v486 = vunpack.c.l.b16 %v476
  %v487 = vunpack.c.l.b16 %v477
  %v488 = vunpack.c.l.b16 %v478
  %v489 = vunpack.c.l.b16 %v479
  %v490 = vpack.c.b16 %v486, %v485
  %v491 = vpack.c.b16 %v488, %v487
  %v492 = vpack.c.b16 %v489, %v489
  %v496 = vsel %vm40, %v492, 0
  %498 = vmatprep.subr.bf16.mxu0 0
  %499 = vmatpush1.bf16.msra.mxu0 0
  %500 = vmatprep.subr.bf16.mxu0 0
  %501 = vmatpush1.bf16.msra.mxu0 0
  %502 = vmatprep.subr.bf16.mxu0 0
  %503 = vmatpush1.bf16.msra.mxu0 0
  %504 = vmatprep.subr.bf16.mxu0 0
  %505 = vmatpush1.bf16.msra.mxu0 0
  %506 = vmatprep.subr.bf16.mxu0 0
  %507 = vmatpush1.bf16.msra.mxu0 0
  %508 = vmatprep.subr.bf16.mxu0 0
  %509 = vmatpush1.bf16.msra.mxu0 %v496
  %510 = vmatprep.subr.bf16.mxu0 0
  %511 = vmatpush1.bf16.msra.mxu0 %v491
  %512 = vmatprep.subr.bf16.mxu0 0
  %513 = vmatpush1.bf16.msra.mxu0 %v490
  %514 = vmatprep.subr.bf16.mxu0 0
  %515 = vmatpush2.bf16.msra.mxu0 0
  %516 = vmatprep.subr.bf16.mxu0 0
  %517 = vmatpush2.bf16.msra.mxu0 0
  %518 = vmatprep.subr.bf16.mxu0 0
  %519 = vmatpush2.bf16.msra.mxu0 0
  %520 = vmatprep.subr.bf16.mxu0 0
  %521 = vmatpush2.bf16.msra.mxu0 0
  %522 = vmatprep.subr.bf16.mxu0 0
  %523 = vmatpush2.bf16.msra.mxu0 0
  %524 = vmatprep.subr.bf16.mxu0 0
  %525 = vmatpush2.bf16.msra.mxu0 0
  %526 = vmatprep.subr.bf16.mxu0 0
  %527 = vmatpush2.bf16.msra.mxu0 0
  %528 = vmatprep.subr.bf16.mxu0 0
  %529 = vmatpush2.bf16.msra.mxu0 0
  %530 = vmatprep.mubr.bf16.mxu0 0
  %531 = vmatmul.mubr.bf16.gmra.mxu0 %v38
  %v532 = vpop.f32.mrf.mxu0
  %v533 = vadd.f32 0.0, %v532
  %v534 = vpop.f32.mrf.mxu0
  %v535 = vpop.f32.mrf.mxu0
  %v536 = vpop.f32.mrf.mxu0
  %537 = vdwg.mxu0
  %v538 = vmax.f32 %v473, %v533
  %s539 = scalar_lea.vmem %s0, 160
  %v540 = vld [vmem:[%s539] sm:$0xf]
  %v541 = vld [vmem:[%s539 + $0x4] sm:$0xf]
  %v542 = vld [vmem:[%s539 + $0x8] sm:$0xf]
  %v543 = vld [vmem:[%s539 + $0xc] sm:$0xf]
  %v544 = vld [vmem:[%s539 + $0x10] sm:$0x3]
  %v550 = vunpack.c.l.b16 %v540
  %v551 = vunpack.c.l.b16 %v541
  %v552 = vunpack.c.l.b16 %v542
  %v553 = vunpack.c.l.b16 %v543
  %v554 = vunpack.c.l.b16 %v544
  %v555 = vpack.c.b16 %v551, %v550
  %v556 = vpack.c.b16 %v553, %v552
  %v557 = vpack.c.b16 %v554, %v554
  %v561 = vsel %vm40, %v557, 0
  %563 = vmatprep.subr.bf16.mxu0 0
  %564 = vmatpush1.bf16.msra.mxu0 0
  %565 = vmatprep.subr.bf16.mxu0 0
  %566 = vmatpush1.bf16.msra.mxu0 0
  %567 = vmatprep.subr.bf16.mxu0 0
  %568 = vmatpush1.bf16.msra.mxu0 0
  %569 = vmatprep.subr.bf16.mxu0 0
  %570 = vmatpush1.bf16.msra.mxu0 0
  %571 = vmatprep.subr.bf16.mxu0 0
  %572 = vmatpush1.bf16.msra.mxu0 0
  %573 = vmatprep.subr.bf16.mxu0 0
  %574 = vmatpush1.bf16.msra.mxu0 %v561
  %575 = vmatprep.subr.bf16.mxu0 0
  %576 = vmatpush1.bf16.msra.mxu0 %v556
  %577 = vmatprep.subr.bf16.mxu0 0
  %578 = vmatpush1.bf16.msra.mxu0 %v555
  %579 = vmatprep.subr.bf16.mxu0 0
  %580 = vmatpush2.bf16.msra.mxu0 0
  %581 = vmatprep.subr.bf16.mxu0 0
  %582 = vmatpush2.bf16.msra.mxu0 0
  %583 = vmatprep.subr.bf16.mxu0 0
  %584 = vmatpush2.bf16.msra.mxu0 0
  %585 = vmatprep.subr.bf16.mxu0 0
  %586 = vmatpush2.bf16.msra.mxu0 0
  %587 = vmatprep.subr.bf16.mxu0 0
  %588 = vmatpush2.bf16.msra.mxu0 0
  %589 = vmatprep.subr.bf16.mxu0 0
  %590 = vmatpush2.bf16.msra.mxu0 0
  %591 = vmatprep.subr.bf16.mxu0 0
  %592 = vmatpush2.bf16.msra.mxu0 0
  %593 = vmatprep.subr.bf16.mxu0 0
  %594 = vmatpush2.bf16.msra.mxu0 0
  %595 = vmatprep.mubr.bf16.mxu0 0
  %596 = vmatmul.mubr.bf16.gmra.mxu0 %v38
  %v597 = vpop.f32.mrf.mxu0
  %v598 = vadd.f32 0.0, %v597
  %v599 = vpop.f32.mrf.mxu0
  %v600 = vpop.f32.mrf.mxu0
  %v601 = vpop.f32.mrf.mxu0
  %602 = vdwg.mxu0
  %v603 = vmax.f32 %v538, %v598
  %s604 = scalar_lea.vmem %s0, 180
  %v605 = vld [vmem:[%s604] sm:$0xf]
  %v606 = vld [vmem:[%s604 + $0x4] sm:$0xf]
  %v607 = vld [vmem:[%s604 + $0x8] sm:$0xf]
  %v608 = vld [vmem:[%s604 + $0xc] sm:$0xf]
  %v609 = vld [vmem:[%s604 + $0x10] sm:$0x3]
  %v615 = vunpack.c.l.b16 %v605
  %v616 = vunpack.c.l.b16 %v606
  %v617 = vunpack.c.l.b16 %v607
  %v618 = vunpack.c.l.b16 %v608
  %v619 = vunpack.c.l.b16 %v609
  %v620 = vpack.c.b16 %v616, %v615
  %v621 = vpack.c.b16 %v618, %v617
  %v622 = vpack.c.b16 %v619, %v619
  %v626 = vsel %vm40, %v622, 0
  %628 = vmatprep.subr.bf16.mxu0 0
  %629 = vmatpush1.bf16.msra.mxu0 0
  %630 = vmatprep.subr.bf16.mxu0 0
  %631 = vmatpush1.bf16.msra.mxu0 0
  %632 = vmatprep.subr.bf16.mxu0 0
  %633 = vmatpush1.bf16.msra.mxu0 0
  %634 = vmatprep.subr.bf16.mxu0 0
  %635 = vmatpush1.bf16.msra.mxu0 0
  %636 = vmatprep.subr.bf16.mxu0 0
  %637 = vmatpush1.bf16.msra.mxu0 0
  %638 = vmatprep.subr.bf16.mxu0 0
  %639 = vmatpush1.bf16.msra.mxu0 %v626
  %640 = vmatprep.subr.bf16.mxu0 0
  %641 = vmatpush1.bf16.msra.mxu0 %v621
  %642 = vmatprep.subr.bf16.mxu0 0
  %643 = vmatpush1.bf16.msra.mxu0 %v620
  %644 = vmatprep.subr.bf16.mxu0 0
  %645 = vmatpush2.bf16.msra.mxu0 0
  %646 = vmatprep.subr.bf16.mxu0 0
  %647 = vmatpush2.bf16.msra.mxu0 0
  %648 = vmatprep.subr.bf16.mxu0 0
  %649 = vmatpush2.bf16.msra.mxu0 0
  %650 = vmatprep.subr.bf16.mxu0 0
  %651 = vmatpush2.bf16.msra.mxu0 0
  %652 = vmatprep.subr.bf16.mxu0 0
  %653 = vmatpush2.bf16.msra.mxu0 0
  %654 = vmatprep.subr.bf16.mxu0 0
  %655 = vmatpush2.bf16.msra.mxu0 0
  %656 = vmatprep.subr.bf16.mxu0 0
  %657 = vmatpush2.bf16.msra.mxu0 0
  %658 = vmatprep.subr.bf16.mxu0 0
  %659 = vmatpush2.bf16.msra.mxu0 0
  %660 = vmatprep.mubr.bf16.mxu0 0
  %661 = vmatmul.mubr.bf16.gmra.mxu0 %v38
  %v662 = vpop.f32.mrf.mxu0
  %v663 = vadd.f32 0.0, %v662
  %v664 = vpop.f32.mrf.mxu0
  %v665 = vpop.f32.mrf.mxu0
  %v666 = vpop.f32.mrf.mxu0
  %667 = vdwg.mxu0
  %v668 = vmax.f32 %v603, %v663
  %s669 = scalar_lea.vmem %s0, 200
  %v670 = vld [vmem:[%s669] sm:$0xf]
  %v671 = vld [vmem:[%s669 + $0x4] sm:$0xf]
  %v672 = vld [vmem:[%s669 + $0x8] sm:$0xf]
  %v673 = vld [vmem:[%s669 + $0xc] sm:$0xf]
  %v674 = vld [vmem:[%s669 + $0x10] sm:$0x3]
  %v680 = vunpack.c.l.b16 %v670
  %v681 = vunpack.c.l.b16 %v671
  %v682 = vunpack.c.l.b16 %v672
  %v683 = vunpack.c.l.b16 %v673
  %v684 = vunpack.c.l.b16 %v674
  %v685 = vpack.c.b16 %v681, %v680
  %v686 = vpack.c.b16 %v683, %v682
  %v687 = vpack.c.b16 %v684, %v684
  %v691 = vsel %vm40, %v687, 0
  %693 = vmatprep.subr.bf16.mxu0 0
  %694 = vmatpush1.bf16.msra.mxu0 0
  %695 = vmatprep.subr.bf16.mxu0 0
  %696 = vmatpush1.bf16.msra.mxu0 0
  %697 = vmatprep.subr.bf16.mxu0 0
  %698 = vmatpush1.bf16.msra.mxu0 0
  %699 = vmatprep.subr.bf16.mxu0 0
  %700 = vmatpush1.bf16.msra.mxu0 0
  %701 = vmatprep.subr.bf16.mxu0 0
  %702 = vmatpush1.bf16.msra.mxu0 0
  %703 = vmatprep.subr.bf16.mxu0 0
  %704 = vmatpush1.bf16.msra.mxu0 %v691
  %705 = vmatprep.subr.bf16.mxu0 0
  %706 = vmatpush1.bf16.msra.mxu0 %v686
  %707 = vmatprep.subr.bf16.mxu0 0
  %708 = vmatpush1.bf16.msra.mxu0 %v685
  %709 = vmatprep.subr.bf16.mxu0 0
  %710 = vmatpush2.bf16.msra.mxu0 0
  %711 = vmatprep.subr.bf16.mxu0 0
  %712 = vmatpush2.bf16.msra.mxu0 0
  %713 = vmatprep.subr.bf16.mxu0 0
  %714 = vmatpush2.bf16.msra.mxu0 0
  %715 = vmatprep.subr.bf16.mxu0 0
  %716 = vmatpush2.bf16.msra.mxu0 0
  %717 = vmatprep.subr.bf16.mxu0 0
  %718 = vmatpush2.bf16.msra.mxu0 0
  %719 = vmatprep.subr.bf16.mxu0 0
  %720 = vmatpush2.bf16.msra.mxu0 0
  %721 = vmatprep.subr.bf16.mxu0 0
  %722 = vmatpush2.bf16.msra.mxu0 0
  %723 = vmatprep.subr.bf16.mxu0 0
  %724 = vmatpush2.bf16.msra.mxu0 0
  %725 = vmatprep.mubr.bf16.mxu0 0
  %726 = vmatmul.mubr.bf16.gmra.mxu0 %v38
  %v727 = vpop.f32.mrf.mxu0
  %v728 = vadd.f32 0.0, %v727
  %v729 = vpop.f32.mrf.mxu0
  %v730 = vpop.f32.mrf.mxu0
  %v731 = vpop.f32.mrf.mxu0
  %732 = vdwg.mxu0
  %v733 = vmax.f32 %v668, %v728
  %s734 = scalar_lea.vmem %s0, 220
  %v735 = vld [vmem:[%s734] sm:$0xf]
  %v736 = vld [vmem:[%s734 + $0x4] sm:$0xf]
  %v737 = vld [vmem:[%s734 + $0x8] sm:$0xf]
  %v738 = vld [vmem:[%s734 + $0xc] sm:$0xf]
  %v739 = vld [vmem:[%s734 + $0x10] sm:$0x3]
  %v745 = vunpack.c.l.b16 %v735
  %v746 = vunpack.c.l.b16 %v736
  %v747 = vunpack.c.l.b16 %v737
  %v748 = vunpack.c.l.b16 %v738
  %v749 = vunpack.c.l.b16 %v739
  %v750 = vpack.c.b16 %v746, %v745
  %v751 = vpack.c.b16 %v748, %v747
  %v752 = vpack.c.b16 %v749, %v749
  %v756 = vsel %vm40, %v752, 0
  %758 = vmatprep.subr.bf16.mxu0 0
  %759 = vmatpush1.bf16.msra.mxu0 0
  %760 = vmatprep.subr.bf16.mxu0 0
  %761 = vmatpush1.bf16.msra.mxu0 0
  %762 = vmatprep.subr.bf16.mxu0 0
  %763 = vmatpush1.bf16.msra.mxu0 0
  %764 = vmatprep.subr.bf16.mxu0 0
  %765 = vmatpush1.bf16.msra.mxu0 0
  %766 = vmatprep.subr.bf16.mxu0 0
  %767 = vmatpush1.bf16.msra.mxu0 0
  %768 = vmatprep.subr.bf16.mxu0 0
  %769 = vmatpush1.bf16.msra.mxu0 %v756
  %770 = vmatprep.subr.bf16.mxu0 0
  %771 = vmatpush1.bf16.msra.mxu0 %v751
  %772 = vmatprep.subr.bf16.mxu0 0
  %773 = vmatpush1.bf16.msra.mxu0 %v750
  %774 = vmatprep.subr.bf16.mxu0 0
  %775 = vmatpush2.bf16.msra.mxu0 0
  %776 = vmatprep.subr.bf16.mxu0 0
  %777 = vmatpush2.bf16.msra.mxu0 0
  %778 = vmatprep.subr.bf16.mxu0 0
  %779 = vmatpush2.bf16.msra.mxu0 0
  %780 = vmatprep.subr.bf16.mxu0 0
  %781 = vmatpush2.bf16.msra.mxu0 0
  %782 = vmatprep.subr.bf16.mxu0 0
  %783 = vmatpush2.bf16.msra.mxu0 0
  %784 = vmatprep.subr.bf16.mxu0 0
  %785 = vmatpush2.bf16.msra.mxu0 0
  %786 = vmatprep.subr.bf16.mxu0 0
  %787 = vmatpush2.bf16.msra.mxu0 0
  %788 = vmatprep.subr.bf16.mxu0 0
  %789 = vmatpush2.bf16.msra.mxu0 0
  %790 = vmatprep.mubr.bf16.mxu0 0
  %791 = vmatmul.mubr.bf16.gmra.mxu0 %v38
  %v792 = vpop.f32.mrf.mxu0
  %v793 = vadd.f32 0.0, %v792
  %v794 = vpop.f32.mrf.mxu0
  %v795 = vpop.f32.mrf.mxu0
  %v796 = vpop.f32.mrf.mxu0
  %797 = vdwg.mxu0
  %v798 = vmax.f32 %v733, %v793
  %s799 = scalar_lea.vmem %s0, 240
  %v800 = vld [vmem:[%s799] sm:$0xf]
  %v801 = vld [vmem:[%s799 + $0x4] sm:$0xf]
  %v802 = vld [vmem:[%s799 + $0x8] sm:$0xf]
  %v803 = vld [vmem:[%s799 + $0xc] sm:$0xf]
  %v804 = vld [vmem:[%s799 + $0x10] sm:$0x3]
  %v810 = vunpack.c.l.b16 %v800
  %v811 = vunpack.c.l.b16 %v801
  %v812 = vunpack.c.l.b16 %v802
  %v813 = vunpack.c.l.b16 %v803
  %v814 = vunpack.c.l.b16 %v804
  %v815 = vpack.c.b16 %v811, %v810
  %v816 = vpack.c.b16 %v813, %v812
  %v817 = vpack.c.b16 %v814, %v814
  %v821 = vsel %vm40, %v817, 0
  %823 = vmatprep.subr.bf16.mxu0 0
  %824 = vmatpush1.bf16.msra.mxu0 0
  %825 = vmatprep.subr.bf16.mxu0 0
  %826 = vmatpush1.bf16.msra.mxu0 0
  %827 = vmatprep.subr.bf16.mxu0 0
  %828 = vmatpush1.bf16.msra.mxu0 0
  %829 = vmatprep.subr.bf16.mxu0 0
  %830 = vmatpush1.bf16.msra.mxu0 0
  %831 = vmatprep.subr.bf16.mxu0 0
  %832 = vmatpush1.bf16.msra.mxu0 0
  %833 = vmatprep.subr.bf16.mxu0 0
  %834 = vmatpush1.bf16.msra.mxu0 %v821
  %835 = vmatprep.subr.bf16.mxu0 0
  %836 = vmatpush1.bf16.msra.mxu0 %v816
  %837 = vmatprep.subr.bf16.mxu0 0
  %838 = vmatpush1.bf16.msra.mxu0 %v815
  %839 = vmatprep.subr.bf16.mxu0 0
  %840 = vmatpush2.bf16.msra.mxu0 0
  %841 = vmatprep.subr.bf16.mxu0 0
  %842 = vmatpush2.bf16.msra.mxu0 0
  %843 = vmatprep.subr.bf16.mxu0 0
  %844 = vmatpush2.bf16.msra.mxu0 0
  %845 = vmatprep.subr.bf16.mxu0 0
  %846 = vmatpush2.bf16.msra.mxu0 0
  %847 = vmatprep.subr.bf16.mxu0 0
  %848 = vmatpush2.bf16.msra.mxu0 0
  %849 = vmatprep.subr.bf16.mxu0 0
  %850 = vmatpush2.bf16.msra.mxu0 0
  %851 = vmatprep.subr.bf16.mxu0 0
  %852 = vmatpush2.bf16.msra.mxu0 0
  %853 = vmatprep.subr.bf16.mxu0 0
  %854 = vmatpush2.bf16.msra.mxu0 0
  %855 = vmatprep.mubr.bf16.mxu0 0
  %856 = vmatmul.mubr.bf16.gmra.mxu0 %v38
  %v857 = vpop.f32.mrf.mxu0
  %v858 = vadd.f32 0.0, %v857
  %v859 = vpop.f32.mrf.mxu0
  %v860 = vpop.f32.mrf.mxu0
  %v861 = vpop.f32.mrf.mxu0
  %862 = vdwg.mxu0
  %v863 = vmax.f32 %v798, %v858
  %s864 = scalar_lea.vmem %s0, 260
  %v865 = vld [vmem:[%s864] sm:$0xf]
  %v866 = vld [vmem:[%s864 + $0x4] sm:$0xf]
  %v867 = vld [vmem:[%s864 + $0x8] sm:$0xf]
  %v868 = vld [vmem:[%s864 + $0xc] sm:$0xf]
  %v869 = vld [vmem:[%s864 + $0x10] sm:$0x3]
  %v875 = vunpack.c.l.b16 %v865
  %v876 = vunpack.c.l.b16 %v866
  %v877 = vunpack.c.l.b16 %v867
  %v878 = vunpack.c.l.b16 %v868
  %v879 = vunpack.c.l.b16 %v869
  %v880 = vpack.c.b16 %v876, %v875
  %v881 = vpack.c.b16 %v878, %v877
  %v882 = vpack.c.b16 %v879, %v879
  %v886 = vsel %vm40, %v882, 0
  %888 = vmatprep.subr.bf16.mxu0 0
  %889 = vmatpush1.bf16.msra.mxu0 0
  %890 = vmatprep.subr.bf16.mxu0 0
  %891 = vmatpush1.bf16.msra.mxu0 0
  %892 = vmatprep.subr.bf16.mxu0 0
  %893 = vmatpush1.bf16.msra.mxu0 0
  %894 = vmatprep.subr.bf16.mxu0 0
  %895 = vmatpush1.bf16.msra.mxu0 0
  %896 = vmatprep.subr.bf16.mxu0 0
  %897 = vmatpush1.bf16.msra.mxu0 0
  %898 = vmatprep.subr.bf16.mxu0 0
  %899 = vmatpush1.bf16.msra.mxu0 %v886
  %900 = vmatprep.subr.bf16.mxu0 0
  %901 = vmatpush1.bf16.msra.mxu0 %v881
  %902 = vmatprep.subr.bf16.mxu0 0
  %903 = vmatpush1.bf16.msra.mxu0 %v880
  %904 = vmatprep.subr.bf16.mxu0 0
  %905 = vmatpush2.bf16.msra.mxu0 0
  %906 = vmatprep.subr.bf16.mxu0 0
  %907 = vmatpush2.bf16.msra.mxu0 0
  %908 = vmatprep.subr.bf16.mxu0 0
  %909 = vmatpush2.bf16.msra.mxu0 0
  %910 = vmatprep.subr.bf16.mxu0 0
  %911 = vmatpush2.bf16.msra.mxu0 0
  %912 = vmatprep.subr.bf16.mxu0 0
  %913 = vmatpush2.bf16.msra.mxu0 0
  %914 = vmatprep.subr.bf16.mxu0 0
  %915 = vmatpush2.bf16.msra.mxu0 0
  %916 = vmatprep.subr.bf16.mxu0 0
  %917 = vmatpush2.bf16.msra.mxu0 0
  %918 = vmatprep.subr.bf16.mxu0 0
  %919 = vmatpush2.bf16.msra.mxu0 0
  %920 = vmatprep.mubr.bf16.mxu0 0
  %921 = vmatmul.mubr.bf16.gmra.mxu0 %v38
  %v922 = vpop.f32.mrf.mxu0
  %v923 = vadd.f32 0.0, %v922
  %v924 = vpop.f32.mrf.mxu0
  %v925 = vpop.f32.mrf.mxu0
  %v926 = vpop.f32.mrf.mxu0
  %927 = vdwg.mxu0
  %v928 = vmax.f32 %v863, %v923
  %s929 = scalar_lea.vmem %s0, 280
  %v930 = vld [vmem:[%s929] sm:$0xf]
  %v931 = vld [vmem:[%s929 + $0x4] sm:$0xf]
  %v932 = vld [vmem:[%s929 + $0x8] sm:$0xf]
  %v933 = vld [vmem:[%s929 + $0xc] sm:$0xf]
  %v934 = vld [vmem:[%s929 + $0x10] sm:$0x3]
  %v940 = vunpack.c.l.b16 %v930
  %v941 = vunpack.c.l.b16 %v931
  %v942 = vunpack.c.l.b16 %v932
  %v943 = vunpack.c.l.b16 %v933
  %v944 = vunpack.c.l.b16 %v934
  %v945 = vpack.c.b16 %v941, %v940
  %v946 = vpack.c.b16 %v943, %v942
  %v947 = vpack.c.b16 %v944, %v944
  %v951 = vsel %vm40, %v947, 0
  %953 = vmatprep.subr.bf16.mxu0 0
  %954 = vmatpush1.bf16.msra.mxu0 0
  %955 = vmatprep.subr.bf16.mxu0 0
  %956 = vmatpush1.bf16.msra.mxu0 0
  %957 = vmatprep.subr.bf16.mxu0 0
  %958 = vmatpush1.bf16.msra.mxu0 0
  %959 = vmatprep.subr.bf16.mxu0 0
  %960 = vmatpush1.bf16.msra.mxu0 0
  %961 = vmatprep.subr.bf16.mxu0 0
  %962 = vmatpush1.bf16.msra.mxu0 0
  %963 = vmatprep.subr.bf16.mxu0 0
  %964 = vmatpush1.bf16.msra.mxu0 %v951
  %965 = vmatprep.subr.bf16.mxu0 0
  %966 = vmatpush1.bf16.msra.mxu0 %v946
  %967 = vmatprep.subr.bf16.mxu0 0
  %968 = vmatpush1.bf16.msra.mxu0 %v945
  %969 = vmatprep.subr.bf16.mxu0 0
  %970 = vmatpush2.bf16.msra.mxu0 0
  %971 = vmatprep.subr.bf16.mxu0 0
  %972 = vmatpush2.bf16.msra.mxu0 0
  %973 = vmatprep.subr.bf16.mxu0 0
  %974 = vmatpush2.bf16.msra.mxu0 0
  %975 = vmatprep.subr.bf16.mxu0 0
  %976 = vmatpush2.bf16.msra.mxu0 0
  %977 = vmatprep.subr.bf16.mxu0 0
  %978 = vmatpush2.bf16.msra.mxu0 0
  %979 = vmatprep.subr.bf16.mxu0 0
  %980 = vmatpush2.bf16.msra.mxu0 0
  %981 = vmatprep.subr.bf16.mxu0 0
  %982 = vmatpush2.bf16.msra.mxu0 0
  %983 = vmatprep.subr.bf16.mxu0 0
  %984 = vmatpush2.bf16.msra.mxu0 0
  %985 = vmatprep.mubr.bf16.mxu0 0
  %986 = vmatmul.mubr.bf16.gmra.mxu0 %v38
  %v987 = vpop.f32.mrf.mxu0
  %v988 = vadd.f32 0.0, %v987
  %v989 = vpop.f32.mrf.mxu0
  %v990 = vpop.f32.mrf.mxu0
  %v991 = vpop.f32.mrf.mxu0
  %992 = vdwg.mxu0
  %v993 = vmax.f32 %v928, %v988
  %s994 = scalar_lea.vmem %s0, 300
  %v995 = vld [vmem:[%s994] sm:$0xf]
  %v996 = vld [vmem:[%s994 + $0x4] sm:$0xf]
  %v997 = vld [vmem:[%s994 + $0x8] sm:$0xf]
  %v998 = vld [vmem:[%s994 + $0xc] sm:$0xf]
  %v999 = vld [vmem:[%s994 + $0x10] sm:$0x3]
  %v1005 = vunpack.c.l.b16 %v995
  %v1006 = vunpack.c.l.b16 %v996
  %v1007 = vunpack.c.l.b16 %v997
  %v1008 = vunpack.c.l.b16 %v998
  %v1009 = vunpack.c.l.b16 %v999
  %v1010 = vpack.c.b16 %v1006, %v1005
  %v1011 = vpack.c.b16 %v1008, %v1007
  %v1012 = vpack.c.b16 %v1009, %v1009
  %v1016 = vsel %vm40, %v1012, 0
  %1018 = vmatprep.subr.bf16.mxu0 0
  %1019 = vmatpush1.bf16.msra.mxu0 0
  %1020 = vmatprep.subr.bf16.mxu0 0
  %1021 = vmatpush1.bf16.msra.mxu0 0
  %1022 = vmatprep.subr.bf16.mxu0 0
  %1023 = vmatpush1.bf16.msra.mxu0 0
  %1024 = vmatprep.subr.bf16.mxu0 0
  %1025 = vmatpush1.bf16.msra.mxu0 0
  %1026 = vmatprep.subr.bf16.mxu0 0
  %1027 = vmatpush1.bf16.msra.mxu0 0
  %1028 = vmatprep.subr.bf16.mxu0 0
  %1029 = vmatpush1.bf16.msra.mxu0 %v1016
  %1030 = vmatprep.subr.bf16.mxu0 0
  %1031 = vmatpush1.bf16.msra.mxu0 %v1011
  %1032 = vmatprep.subr.bf16.mxu0 0
  %1033 = vmatpush1.bf16.msra.mxu0 %v1010
  %1034 = vmatprep.subr.bf16.mxu0 0
  %1035 = vmatpush2.bf16.msra.mxu0 0
  %1036 = vmatprep.subr.bf16.mxu0 0
  %1037 = vmatpush2.bf16.msra.mxu0 0
  %1038 = vmatprep.subr.bf16.mxu0 0
  %1039 = vmatpush2.bf16.msra.mxu0 0
  %1040 = vmatprep.subr.bf16.mxu0 0
  %1041 = vmatpush2.bf16.msra.mxu0 0
  %1042 = vmatprep.subr.bf16.mxu0 0
  %1043 = vmatpush2.bf16.msra.mxu0 0
  %1044 = vmatprep.subr.bf16.mxu0 0
  %1045 = vmatpush2.bf16.msra.mxu0 0
  %1046 = vmatprep.subr.bf16.mxu0 0
  %1047 = vmatpush2.bf16.msra.mxu0 0
  %1048 = vmatprep.subr.bf16.mxu0 0
  %1049 = vmatpush2.bf16.msra.mxu0 0
  %1050 = vmatprep.mubr.bf16.mxu0 0
  %1051 = vmatmul.mubr.bf16.gmra.mxu0 %v38
  %v1052 = vpop.f32.mrf.mxu0
  %v1053 = vadd.f32 0.0, %v1052
  %v1054 = vpop.f32.mrf.mxu0
  %v1055 = vpop.f32.mrf.mxu0
  %v1056 = vpop.f32.mrf.mxu0
  %1057 = vdwg.mxu0
  %v1058 = vmax.f32 %v993, %v1053
  %v1059 = vld [vmem:[%s2] sm:$0xf]
  %1061 = vset.pattern.permute.xlu0 0
  %1062 = vperm.xlu0 %1061, %v1059
  %v1063 = vpop.permute.xlu0 %1062
  %v1065 = vadd.f32 %v1058, %v1063
  %v1066 = vadd.f32 %v1065, %v1065
  %v1067 = vmax.f32 %v1066, 0.0
  %vm1068 = vcmask 11264
  %1069 = vst.msk [vmem:[%s3] sm:$0xf] %vm1068, %v1067
  // Predicated region
  $region14: #{residual_network_forward.3} parent=0 // pred_check
    _
  $region15: #{residual_network_forward.3} parent=0 // pred_check_branch
    %1071 = sbr.rel (0) target = $region17
  $region16: #{residual_network_forward.3} parent=0 // pred_region
    _
  $region17: #{residual_network_forward.3} parent=0 // pred_fallthru
    _
  // Predicated region
  $region18: #{residual_network_forward.3} parent=0 // pred_check
    _
  $region19: #{residual_network_forward.3} parent=0 // pred_check_branch
    %1073 = sbr.rel (0) target = $region21
  $region20: #{residual_network_forward.3} parent=0 // pred_region
    _
  $region21: #{residual_network_forward.3} parent=0 // pred_fallthru
    _

</llo_original>
